<compile_context>
chip_gen: v5e
topology: v5e:2x2
jax: 0.10.0
libtpu: 0.0.40
codegen_flags: <defaults>
</compile_context>

<pallas_src>
import math

import jax
import jax.numpy as jnp
from jax.experimental import pallas as pl
from jax.experimental.pallas import tpu as pltpu


def _round_up(n, m):
    return (n + m - 1) // m * m


def _vmem_capacity_bytes():
    try:
        return int(pltpu.get_tpu_info().vmem_capacity_bytes)
    except Exception:
        return 64 << 20  # conservative fallback: v7x per-TensorCore VMEM


def _use_bf16_elementwise():
    # bf16 VALU exists on v6e/v7x; v5e and older only have an f32 datapath.
    try:
        kind = jax.devices()[0].device_kind.lower()
    except Exception:
        return False
    return not any(v in kind for v in ("v2", "v3", "v4", "v5"))


def _single_buffered(block_shape, index_map):
    """BlockSpec for a constant-index block: 1 buffer instead of 2."""
    try:
        return pl.BlockSpec(block_shape, index_map, pipeline_mode=pl.Buffered(1))
    except Exception:  # older jax without pipeline_mode / Buffered
        return pl.BlockSpec(block_shape, index_map)


def _txtnet_kernel_resident(alpha_ref, x_ref, w1_ref, b1_ref, w2_ref, b2_ref,
                            o_ref):
    alpha = alpha_ref[0, 0]                               # runtime SMEM scalar

    # ---- fc1 (bf16 MXU operands, f32 accumulation) ---------------------------
    x = x_ref[...].astype(jnp.bfloat16)                   # (TB, F)
    feat = jnp.dot(x, w1_ref[...],                        # (TB, 4096) f32
                   preferred_element_type=jnp.float32)

    # ---- bias + ReLU + downcast in the elementwise dtype picked per chip -----
    ew = b1_ref.dtype                                     # bf16 (v6e/v7x) or f32 (v5e)
    feat = jnp.maximum(feat.astype(ew) + b1_ref[...], 0.0).astype(jnp.bfloat16)

    # ---- dropout (eval mode -> identity) + fc_encode --------------------------
    hid = jnp.dot(feat, w2_ref[...],                      # (TB, Cp) f32
                  preferred_element_type=jnp.float32)
    hid = hid + b2_ref[...]

    # ---- scaled tanh (alpha fused on the small output tile only) --------------
    o_ref[...] = jnp.tanh(hid * alpha).astype(o_ref.dtype)


def _txtnet_kernel_ktiled(alpha_ref, x_ref, w1_ref, b1_ref, w2_ref, b2_ref,
                          o_ref, acc_ref):
    k = pl.program_id(1)

    @pl.when(k == 0)
    def _init():
        acc_ref[...] = jnp.zeros_like(acc_ref)

    x = x_ref[...].astype(jnp.bfloat16)                   # (TB, TF)
    acc_ref[...] += jnp.dot(x, w1_ref[...],               # accumulate feat in f32
                            preferred_element_type=jnp.float32)

    @pl.when(k == pl.num_programs(1) - 1)
    def _finalize():
        alpha = alpha_ref[0, 0]
        ew = b1_ref.dtype
        feat = jnp.maximum(acc_ref[...].astype(ew) + b1_ref[...],
                           0.0).astype(jnp.bfloat16)
        hid = jnp.dot(feat, w2_ref[...], preferred_element_type=jnp.float32)
        hid = hid + b2_ref[...]
        o_ref[...] = jnp.tanh(hid * alpha).astype(o_ref.dtype)


def txtnet_forward(x, w1, b1, w2, b2, alpha=1.0, *,
                   block_b=256, block_f=512, force_k_tiling=False):
    """TxtNet forward (inference-mode dropout).

    x:  (B, txt_feat_len) f32
    w1: (txt_feat_len, 4096), b1: (4096,)   -- fc1, pre-transposed to (in, out)
    w2: (4096, code_len),     b2: (code_len,)
    alpha: python float or traced scalar (runtime value, no recompile).
    Returns code: (B, code_len) f32.
    """
    B, F = x.shape
    H = w1.shape[1]
    C = w2.shape[1]

    bf16_ew = _use_bf16_elementwise()
    ew_dtype = jnp.bfloat16 if bf16_ew else jnp.float32
    ew_bytes = 2 if bf16_ew else 4

    # ---- batch tiling --------------------------------------------------------
    TB = min(block_b, max(8, _round_up(B, 8)))
    # Keep >= 2 batch tiles when the batch is large enough so the "parallel"
    # grid axis can feed both v7x TensorCores (each half still >= 128 rows).
    if _round_up(B, TB) == TB and TB >= 256:
        TB = max(128, _round_up(pl.cdiv(B, 2), 8))
    B_pad = _round_up(B, TB)
    if B_pad != B:
        x = jnp.pad(x, ((0, B_pad - B), (0, 0)))

    # ---- pad code_len to a full 128-lane tile (unmasked, lane-dense stores) --
    Cp = _round_up(C, 128)
    if Cp != C:
        w2 = jnp.pad(w2, ((0, 0), (0, Cp - C)))
        b2 = jnp.pad(b2, (0, Cp - C))

    # Cast weights to bf16 once (halves weight DMA); bias dtypes carry the
    # elementwise-precision choice into the kernel.
    w1_bf = w1.astype(jnp.bfloat16)
    w2_bf = w2.astype(jnp.bfloat16)
    b1_2d = b1.reshape(1, H).astype(ew_dtype)
    b2_2d = b2.reshape(1, Cp).astype(jnp.float32)
    alpha_arr = jnp.asarray(alpha, jnp.float32).reshape(1, 1)

    vmem_ceiling = int(_vmem_capacity_bytes() * 0.85)

    # Footprint of the resident-weights path (weights single-buffered).
    resident_bytes = (
        2 * TB * F * 4          # x tile (double-buffered)
        + F * H * 2             # w1 (bf16, single-buffered)
        + H * ew_bytes          # b1
        + H * Cp * 2            # w2 (bf16, single-buffered)
        + Cp * 4                # b2
        + 2 * TB * Cp * 4       # out tile (double-buffered)
        + TB * H * 4            # feat intermediate / headroom
    )
    use_k_tiling = force_k_tiling or int(resident_bytes * 1.25) > vmem_ceiling

    if not use_k_tiling:
        vmem_bytes = min(vmem_ceiling, max(8 << 20, int(resident_bytes * 1.3)))
        grid = (B_pad // TB,)
        out = pl.pallas_call(
            _txtnet_kernel_resident,
            out_shape=jax.ShapeDtypeStruct((B_pad, Cp), jnp.float32),
            grid=grid,
            in_specs=[
                pl.BlockSpec((1, 1), lambda i: (0, 0),
                             memory_space=pltpu.MemorySpace.SMEM),  # alpha
                pl.BlockSpec((TB, F), lambda i: (i, 0)),            # x: batch-tiled
                _single_buffered((F, H), lambda i: (0, 0)),         # w1 resident
                _single_buffered((1, H), lambda i: (0, 0)),         # b1 resident
                _single_buffered((H, Cp), lambda i: (0, 0)),        # w2 resident
                _single_buffered((1, Cp), lambda i: (0, 0)),        # b2 resident
            ],
            out_specs=pl.BlockSpec((TB, Cp), lambda i: (i, 0)),
            compiler_params=pltpu.CompilerParams(
                dimension_semantics=("parallel",),                  # megacore
                vmem_limit_bytes=vmem_bytes,
            ),
        )(alpha_arr, x, w1_bf, b1_2d, w2_bf, b2_2d)
    else:
        # ---- K-tiled fallback: stream w1 over txt_feat_len chunks ------------
        TF = max(128, _round_up(min(block_f, F), 128))
        F_pad = _round_up(F, TF)
        if F_pad != F:
            x = jnp.pad(x, ((0, 0), (0, F_pad - F)))
            w1_bf = jnp.pad(w1_bf, ((0, F_pad - F), (0, 0)))
        ktiled_bytes = (
            2 * TB * TF * 4         # x tile (double-buffered)
            + 2 * TF * H * 2        # w1 chunk (double-buffered: changes per k)
            + H * ew_bytes          # b1
            + H * Cp * 2            # w2 (single-buffered)
            + Cp * 4                # b2
            + 2 * TB * Cp * 4       # out tile
            + TB * H * 4            # feat accumulator scratch
        )
        vmem_bytes = min(vmem_ceiling, max(8 << 20, int(ktiled_bytes * 1.3)))
        grid = (B_pad // TB, F_pad // TF)
        out = pl.pallas_call(
            _txtnet_kernel_ktiled,
            out_shape=jax.ShapeDtypeStruct((B_pad, Cp), jnp.float32),
            grid=grid,
            in_specs=[
                pl.BlockSpec((1, 1), lambda i, k: (0, 0),
                             memory_space=pltpu.MemorySpace.SMEM),  # alpha
                pl.BlockSpec((TB, TF), lambda i, k: (i, k)),        # x chunk
                pl.BlockSpec((TF, H), lambda i, k: (k, 0)),         # w1 chunk
                _single_buffered((1, H), lambda i, k: (0, 0)),      # b1
                _single_buffered((H, Cp), lambda i, k: (0, 0)),     # w2
                _single_buffered((1, Cp), lambda i, k: (0, 0)),     # b2
            ],
            out_specs=pl.BlockSpec((TB, Cp), lambda i, k: (i, 0)),
            scratch_shapes=[pltpu.VMEM((TB, H), jnp.float32)],
            compiler_params=pltpu.CompilerParams(
                dimension_semantics=("parallel", "arbitrary"),
                vmem_limit_bytes=vmem_bytes,
            ),
        )(alpha_arr, x, w1_bf, b1_2d, w2_bf, b2_2d)

    return out[:B, :C]


def _reference_kernel_math(x, w1, b1, w2, b2, alpha, bf16_elementwise):
    # Mirrors the kernel's math (bf16 MXU operands, f32 accumulation, and the
    # same elementwise dtype the wrapper picks for the running chip).
    ew = jnp.bfloat16 if bf16_elementwise else jnp.float32
    feat = jnp.dot(x.astype(jnp.bfloat16), w1.astype(jnp.bfloat16),
                   preferred_element_type=jnp.float32)
    feat = jnp.maximum(feat.astype(ew) + b1.astype(ew), 0.0).astype(jnp.bfloat16)
    hid = jnp.dot(feat, w2.astype(jnp.bfloat16),
                  preferred_element_type=jnp.float32) + b2
    return jnp.tanh(jnp.float32(alpha) * hid)


def _reference_f32(x, w1, b1, w2, b2, alpha):
    feat = jnp.maximum(x @ w1 + b1, 0.0)
    hid = feat @ w2 + b2
    return jnp.tanh(alpha * hid)


if __name__ == "__main__":
    # Small, module-consistent shapes.
    batch = 8
    txt_feat_len = 32
    hidden = 4096          # fixed by the module (fc1 -> 4096)
    code_len = 16

    key = jax.random.PRNGKey(0)
    kx, kw1, kb1, kw2, kb2, kx2, kw1b = jax.random.split(key, 7)

    x = jax.random.normal(kx, (batch, txt_feat_len), dtype=jnp.float32)

    # fc1: deterministic init (PyTorch default is uniform).
    bound1 = 1.0 / math.sqrt(txt_feat_len)
    w1 = jax.random.uniform(kw1, (txt_feat_len, hidden),
                            minval=-bound1, maxval=bound1, dtype=jnp.float32)
    b1 = jax.random.uniform(kb1, (hidden,),
                            minval=-bound1, maxval=bound1, dtype=jnp.float32)

    # fc_encode: weight ~ N(0, 0.3) as in the module's explicit init.
    w2 = 0.3 * jax.random.normal(kw2, (hidden, code_len), dtype=jnp.float32)
    bound2 = 1.0 / math.sqrt(hidden)
    b2 = jax.random.uniform(kb2, (code_len,),
                            minval=-bound2, maxval=bound2, dtype=jnp.float32)

    bf16_ew = _use_bf16_elementwise()
    fwd = jax.jit(txtnet_forward,
                  static_argnames=("block_b", "block_f", "force_k_tiling"))

    # ---- resident-weights path; two alphas exercise the runtime SMEM scalar --
    for alpha in (1.0, 1.5):   # iter_num == 0 => alpha = init_scale = 1.0
        code = fwd(x, w1, b1, w2, b2, alpha)
        jax.block_until_ready(code)
        assert code.shape == (batch, code_len)

        ref_kernel = _reference_kernel_math(x, w1, b1, w2, b2, alpha, bf16_ew)
        ref_f32 = _reference_f32(x, w1, b1, w2, b2, alpha)
        # Tight check vs. a reference using the kernel's own bf16/f32 math.
        assert jnp.allclose(code, ref_kernel, atol=5e-3, rtol=5e-3), \
            "resident path mismatch vs kernel-math reference"
        # Loose sanity check vs. the full-f32 PyTorch-equivalent math.
        assert jnp.allclose(code, ref_f32, atol=7e-2, rtol=2e-2), \
            "resident path mismatch vs f32 reference"

    # ---- K-tiled fallback path (forced; small block_f => several K steps) ----
    batch2, feat2 = 20, 300
    x2 = jax.random.normal(kx2, (batch2, feat2), dtype=jnp.float32)
    bound1b = 1.0 / math.sqrt(feat2)
    w1b = jax.random.uniform(kw1b, (feat2, hidden),
                             minval=-bound1b, maxval=bound1b, dtype=jnp.float32)

    code2 = fwd(x2, w1b, b1, w2, b2, 1.0, block_f=128, force_k_tiling=True)
    jax.block_until_ready(code2)
    assert code2.shape == (batch2, code_len)
    ref2 = _reference_kernel_math(x2, w1b, b1, w2, b2, 1.0, bf16_ew)
    assert jnp.allclose(code2, ref2, atol=5e-3, rtol=5e-3), \
        "k-tiled path mismatch vs kernel-math reference"

    print("KERNEL_OK")
</pallas_src>

<mosaic_0001>
module attributes {stable_mosaic.version = 11 : i64} {
  func.func @_txtnet_kernel_resident(%arg0: i32, %arg1: memref<1x1xf32, #tpu.memory_space<smem>>, %arg2: memref<8x32xf32, #tpu.memory_space<vmem>>, %arg3: memref<32x4096xbf16, #tpu.memory_space<vmem>>, %arg4: memref<1x4096xbf16, #tpu.memory_space<vmem>>, %arg5: memref<4096x128xbf16, #tpu.memory_space<vmem>>, %arg6: memref<1x128xf32, #tpu.memory_space<vmem>>, %arg7: memref<8x128xf32, #tpu.memory_space<vmem>>) attributes {dimension_semantics = [#tpu.dimension_semantics<parallel>], iteration_bounds = array<i64: 1>, scalar_prefetch = 0 : i64, scratch_operands = 0 : i64, tpu.core_type = #tpu.core_type<tc>, window_params = [{transform_indices = @transform_0, window_bounds = array<i64: 1, 1>}, {transform_indices = @transform_1, window_bounds = array<i64: 8, 32>}, {pipeline_mode = #tpu.pipeline_mode<synchronous>, transform_indices = @transform_2, window_bounds = array<i64: 32, 4096>}, {pipeline_mode = #tpu.pipeline_mode<synchronous>, transform_indices = @transform_3, window_bounds = array<i64: 1, 4096>}, {pipeline_mode = #tpu.pipeline_mode<synchronous>, transform_indices = @transform_4, window_bounds = array<i64: 4096, 128>}, {pipeline_mode = #tpu.pipeline_mode<synchronous>, transform_indices = @transform_5, window_bounds = array<i64: 1, 128>}, {transform_indices = @transform_6, window_bounds = array<i64: 8, 128>}]} {
    %c0 = arith.constant 0 : index
    %c0_0 = arith.constant 0 : index
    %0 = memref.load %arg1[%c0, %c0_0] : memref<1x1xf32, #tpu.memory_space<smem>>
    %c0_1 = arith.constant 0 : index
    %c0_2 = arith.constant 0 : index
    %1 = vector.load %arg2[%c0_1, %c0_2] : memref<8x32xf32, #tpu.memory_space<vmem>>, vector<8x32xf32>
    %2 = arith.truncf %1 : vector<8x32xf32> to vector<8x32xbf16>
    %c0_3 = arith.constant 0 : index
    %c0_4 = arith.constant 0 : index
    %3 = vector.load %arg3[%c0_3, %c0_4] : memref<32x4096xbf16, #tpu.memory_space<vmem>>, vector<32x4096xbf16>
    %cst = arith.constant dense<0.000000e+00> : vector<8x4096xf32>
    %4 = tpu.matmul %2, %3, %cst {dimension_numbers = #tpu.dot_dimension_numbers<[1], [0], [0], [1], [0, 0, 1, 1], [], []>} : vector<8x32xbf16>, vector<32x4096xbf16>, vector<8x4096xf32> -> vector<8x4096xf32>
    %5 = arith.truncf %4 : vector<8x4096xf32> to vector<8x4096xbf16>
    %c0_5 = arith.constant 0 : index
    %c0_6 = arith.constant 0 : index
    %6 = vector.load %arg4[%c0_5, %c0_6] : memref<1x4096xbf16, #tpu.memory_space<vmem>>, vector<1x4096xbf16>
    %7 = vector.broadcast %6 : vector<1x4096xbf16> to vector<8x4096xbf16>
    %8 = arith.addf %5, %7 : vector<8x4096xbf16>
    %cst_7 = arith.constant 0.000000e+00 : bf16
    %9 = vector.broadcast %cst_7 : bf16 to vector<8x4096xbf16>
    %10 = arith.maximumf %8, %9 : vector<8x4096xbf16>
    %c0_8 = arith.constant 0 : index
    %c0_9 = arith.constant 0 : index
    %11 = vector.load %arg5[%c0_8, %c0_9] : memref<4096x128xbf16, #tpu.memory_space<vmem>>, vector<4096x128xbf16>
    %cst_10 = arith.constant dense<0.000000e+00> : vector<8x128xf32>
    %12 = tpu.matmul %10, %11, %cst_10 {dimension_numbers = #tpu.dot_dimension_numbers<[1], [0], [0], [1], [0, 0, 1, 1], [], []>} : vector<8x4096xbf16>, vector<4096x128xbf16>, vector<8x128xf32> -> vector<8x128xf32>
    %c0_11 = arith.constant 0 : index
    %c0_12 = arith.constant 0 : index
    %13 = vector.load %arg6[%c0_11, %c0_12] : memref<1x128xf32, #tpu.memory_space<vmem>>, vector<1x128xf32>
    %14 = vector.broadcast %13 : vector<1x128xf32> to vector<8x128xf32>
    %15 = arith.addf %12, %14 : vector<8x128xf32>
    %16 = vector.broadcast %0 : f32 to vector<8x128xf32>
    %17 = arith.mulf %15, %16 : vector<8x128xf32>
    %18 = math.tanh %17 : vector<8x128xf32>
    %c0_13 = arith.constant 0 : index
    %c0_14 = arith.constant 0 : index
    %19 = vector.load %arg7[%c0_13, %c0_14] : memref<8x128xf32, #tpu.memory_space<vmem>>, vector<8x128xf32>
    tpu.vector_store %arg7[%c0_13, %c0_14], %18 {strides = array<i32>} : memref<8x128xf32, #tpu.memory_space<vmem>>, vector<8x128xf32>,
    return
  }
  func.func @transform_0(%arg0: i32) -> (i32, i32) {
    %c0_i32 = arith.constant 0 : i32
    %c0_i32_0 = arith.constant 0 : i32
    %c0_i32_1 = arith.constant 0 : i32
    return %c0_i32, %c0_i32_0 : i32, i32
  }
  func.func @transform_1(%arg0: i32) -> (i32, i32) {
    %c0_i32 = arith.constant 0 : i32
    %c0_i32_0 = arith.constant 0 : i32
    return %arg0, %c0_i32 : i32, i32
  }
  func.func @transform_2(%arg0: i32) -> (i32, i32) {
    %c0_i32 = arith.constant 0 : i32
    %c0_i32_0 = arith.constant 0 : i32
    %c0_i32_1 = arith.constant 0 : i32
    return %c0_i32, %c0_i32_0 : i32, i32
  }
  func.func @transform_3(%arg0: i32) -> (i32, i32) {
    %c0_i32 = arith.constant 0 : i32
    %c0_i32_0 = arith.constant 0 : i32
    %c0_i32_1 = arith.constant 0 : i32
    return %c0_i32, %c0_i32_0 : i32, i32
  }
  func.func @transform_4(%arg0: i32) -> (i32, i32) {
    %c0_i32 = arith.constant 0 : i32
    %c0_i32_0 = arith.constant 0 : i32
    %c0_i32_1 = arith.constant 0 : i32
    return %c0_i32, %c0_i32_0 : i32, i32
  }
  func.func @transform_5(%arg0: i32) -> (i32, i32) {
    %c0_i32 = arith.constant 0 : i32
    %c0_i32_0 = arith.constant 0 : i32
    %c0_i32_1 = arith.constant 0 : i32
    return %c0_i32, %c0_i32_0 : i32, i32
  }
  func.func @transform_6(%arg0: i32) -> (i32, i32) {
    %c0_i32 = arith.constant 0 : i32
    %c0_i32_0 = arith.constant 0 : i32
    return %arg0, %c0_i32 : i32, i32
  }
}

</mosaic_0001>

<llo_original>
// kernel: txtnet_forward.1
$region0: #{txtnet_forward.1}
  #allocation0 [shape = 'u32[]', space=smem, size = 0x4, offset = 0x4, fixed_abs, tag = 'smem constant byte address 0x4 - core index']
  #allocation1 [shape = 'u32[72,128]{1,0:T(1,128)}', space=vmem, size = 0x9000, scoped, tag = 'internal scratch']
  #allocation2 [shape = 'f32[1,1]{1,0:T(1,128)S(6)}', space=smem, size = 0x200, scoped, tag = 'scoped memory for txtnet_forward.1']
  %s0 = inlined_call_operand.<no memory space> [shape: f32[1,1], index: 0, kind: input, shape index: {}]
  %s1 = inlined_call_operand.vmem [shape: f32[8,32], index: 1, kind: input, shape index: {}]
  %s2 = inlined_call_operand.vmem [shape: bf16[32,4096], index: 2, kind: input, shape index: {}]
  %s3 = inlined_call_operand.vmem [shape: bf16[1,4096], index: 3, kind: input, shape index: {}]
  %s4 = inlined_call_operand.vmem [shape: bf16[4096,128], index: 4, kind: input, shape index: {}]
  %s5 = inlined_call_operand.vmem [shape: f32[1,128], index: 5, kind: input, shape index: {}]
  %s6 = inlined_call_operand.hbm [shape: f32[8,128], index: 6, kind: output, shape index: {}]
  %s7 = sld [smem:[#allocation0]]
  $region34: #{txtnet_forward.1} parent=0
    _
  %s9 = ssub.s32 1, %s7
  %s10 = scalar_select 0, %s9, %s7
  %11 = sst [smem:[#allocation2]] %s0
  $region1: #{txtnet_forward.1} parent=0
    #allocation3 [shape = 'u8[4096]{0}', space=vmem, size = 0x1000, scoped, tag = 'output window, operand 0, single buffered']
    #allocation4 [shape = 's32[1]{0}', space=sflag, size = 0x4, scoped, tag = 'scoped memory for txtnet_forward.1']
    %12 = vsyncpa [#allocation4], 0
    // Predicated region
    $region2: #{txtnet_forward.1} parent=1 // pred_check
      _
    $region3: #{txtnet_forward.1} parent=1 // pred_check_branch
      %14 = sbr.rel (0) target = $region5
    $region4: #{txtnet_forward.1} parent=1 // pred_region
      _
    $region5: #{txtnet_forward.1} parent=1 // pred_fallthru
      _
    // Predicated region
    $region6: #{txtnet_forward.1} parent=1 // pred_check
      _
    $region7: #{txtnet_forward.1} parent=1 // pred_check_branch
      %16 = sbr.rel (0) target = $region9
    $region8: #{txtnet_forward.1} parent=1 // pred_region
      _
    $region9: #{txtnet_forward.1} parent=1 // pred_fallthru
      _
    // Predicated region
    $region10: #{txtnet_forward.1} parent=1 // pred_check
      _
    $region11: #{txtnet_forward.1} parent=1 // pred_check_branch
      %18 = sbr.rel (0) target = $region13
    $region12: #{txtnet_forward.1} parent=1 // pred_region
      _
    $region13: #{txtnet_forward.1} parent=1 // pred_fallthru
      _
    // Predicated region
    $region14: #{txtnet_forward.1} parent=1 // pred_check
      _
    $region15: #{txtnet_forward.1} parent=1 // pred_check_branch
      %20 = sbr.rel (0) target = $region17
    $region16: #{txtnet_forward.1} parent=1 // pred_region
      _
    $region17: #{txtnet_forward.1} parent=1 // pred_fallthru
      _
    // Predicated region
    $region18: #{txtnet_forward.1} parent=1 // pred_check
      _
    $region19: #{txtnet_forward.1} parent=1 // pred_check_branch
      %22 = sbr.rel (0) target = $region21
    $region20: #{txtnet_forward.1} parent=1 // pred_region
      _
    $region21: #{txtnet_forward.1} parent=1 // pred_fallthru
      _
    // Predicated region
    $region22: #{txtnet_forward.1} parent=1 // pred_check
      _
    $region23: #{txtnet_forward.1} parent=1 // pred_check_branch
      %24 = sbr.rel (0) target = $region25
    $region24: #{txtnet_forward.1} parent=1 // pred_region
      _
    $region25: #{txtnet_forward.1} parent=1 // pred_fallthru
      _
    %s26 = sld [smem:[#allocation2]]
    %v27 = vld [vmem:[%s1] sm:$0xff]
    %v28 = vpack.c.bf16 %v27, %v27
    %v29 = vld [vmem:[%s2] sm:$0xff]
    %v30 = vld [vmem:[%s2 + $0x8] sm:$0xff]
    %v31 = vld [vmem:[%s2 + $0x10] sm:$0xff]
    %v32 = vld [vmem:[%s2 + $0x18] sm:$0xff]
    %v33 = vld [vmem:[%s2 + $0x20] sm:$0xff]
    %v34 = vld [vmem:[%s2 + $0x28] sm:$0xff]
    %v35 = vld [vmem:[%s2 + $0x30] sm:$0xff]
    %v36 = vld [vmem:[%s2 + $0x38] sm:$0xff]
    %v37 = vld [vmem:[%s2 + $0x40] sm:$0xff]
    %v38 = vld [vmem:[%s2 + $0x48] sm:$0xff]
    %v39 = vld [vmem:[%s2 + $0x50] sm:$0xff]
    %v40 = vld [vmem:[%s2 + $0x58] sm:$0xff]
    %v41 = vld [vmem:[%s2 + $0x60] sm:$0xff]
    %v42 = vld [vmem:[%s2 + $0x68] sm:$0xff]
    %v43 = vld [vmem:[%s2 + $0x70] sm:$0xff]
    %v44 = vld [vmem:[%s2 + $0x78] sm:$0xff]
    %v45 = vld [vmem:[%s2 + $0x80] sm:$0xff]
    %v46 = vld [vmem:[%s2 + $0x88] sm:$0xff]
    %v47 = vld [vmem:[%s2 + $0x90] sm:$0xff]
    %v48 = vld [vmem:[%s2 + $0x98] sm:$0xff]
    %v49 = vld [vmem:[%s2 + $0xa0] sm:$0xff]
    %v50 = vld [vmem:[%s2 + $0xa8] sm:$0xff]
    %v51 = vld [vmem:[%s2 + $0xb0] sm:$0xff]
    %v52 = vld [vmem:[%s2 + $0xb8] sm:$0xff]
    %v53 = vld [vmem:[%s2 + $0xc0] sm:$0xff]
    %v54 = vld [vmem:[%s2 + $0xc8] sm:$0xff]
    %v55 = vld [vmem:[%s2 + $0xd0] sm:$0xff]
    %v56 = vld [vmem:[%s2 + $0xd8] sm:$0xff]
    %v57 = vld [vmem:[%s2 + $0xe0] sm:$0xff]
    %v58 = vld [vmem:[%s2 + $0xe8] sm:$0xff]
    %v59 = vld [vmem:[%s2 + $0xf0] sm:$0xff]
    %v60 = vld [vmem:[%s2 + $0xf8] sm:$0xff]
    %v61 = vld [vmem:[%s2 + $0x100] sm:$0xff]
    %v62 = vld [vmem:[%s2 + $0x108] sm:$0xff]
    %v63 = vld [vmem:[%s2 + $0x110] sm:$0xff]
    %v64 = vld [vmem:[%s2 + $0x118] sm:$0xff]
    %v65 = vld [vmem:[%s2 + $0x120] sm:$0xff]
    %v66 = vld [vmem:[%s2 + $0x128] sm:$0xff]
    %v67 = vld [vmem:[%s2 + $0x130] sm:$0xff]
    %v68 = vld [vmem:[%s2 + $0x138] sm:$0xff]
    %v69 = vld [vmem:[%s2 + $0x140] sm:$0xff]
    %v70 = vld [vmem:[%s2 + $0x148] sm:$0xff]
    %v71 = vld [vmem:[%s2 + $0x150] sm:$0xff]
    %v72 = vld [vmem:[%s2 + $0x158] sm:$0xff]
    %v73 = vld [vmem:[%s2 + $0x160] sm:$0xff]
    %v74 = vld [vmem:[%s2 + $0x168] sm:$0xff]
    %v75 = vld [vmem:[%s2 + $0x170] sm:$0xff]
    %v76 = vld [vmem:[%s2 + $0x178] sm:$0xff]
    %v77 = vld [vmem:[%s2 + $0x180] sm:$0xff]
    %v78 = vld [vmem:[%s2 + $0x188] sm:$0xff]
    %v79 = vld [vmem:[%s2 + $0x190] sm:$0xff]
    %v80 = vld [vmem:[%s2 + $0x198] sm:$0xff]
    %v81 = vld [vmem:[%s2 + $0x1a0] sm:$0xff]
    %v82 = vld [vmem:[%s2 + $0x1a8] sm:$0xff]
    %v83 = vld [vmem:[%s2 + $0x1b0] sm:$0xff]
    %v84 = vld [vmem:[%s2 + $0x1b8] sm:$0xff]
    %v85 = vld [vmem:[%s2 + $0x1c0] sm:$0xff]
    %v86 = vld [vmem:[%s2 + $0x1c8] sm:$0xff]
    %v87 = vld [vmem:[%s2 + $0x1d0] sm:$0xff]
    %v88 = vld [vmem:[%s2 + $0x1d8] sm:$0xff]
    %v89 = vld [vmem:[%s2 + $0x1e0] sm:$0xff]
    %v90 = vld [vmem:[%s2 + $0x1e8] sm:$0xff]
    %v91 = vld [vmem:[%s2 + $0x1f0] sm:$0xff]
    %v92 = vld [vmem:[%s2 + $0x1f8] sm:$0xff]
    %v157 = vunpack.c.l.b16 %v29
    %v158 = vunpack.c.h.b16 %v29
    %v159 = vunpack.c.l.b16 %v30
    %v160 = vunpack.c.h.b16 %v30
    %v161 = vunpack.c.l.b16 %v31
    %v162 = vunpack.c.h.b16 %v31
    %v163 = vunpack.c.l.b16 %v32
    %v164 = vunpack.c.h.b16 %v32
    %v165 = vunpack.c.l.b16 %v33
    %v166 = vunpack.c.h.b16 %v33
    %v167 = vunpack.c.l.b16 %v34
    %v168 = vunpack.c.h.b16 %v34
    %v169 = vunpack.c.l.b16 %v35
    %v170 = vunpack.c.h.b16 %v35
    %v171 = vunpack.c.l.b16 %v36
    %v172 = vunpack.c.h.b16 %v36
    %v173 = vunpack.c.l.b16 %v37
    %v174 = vunpack.c.h.b16 %v37
    %v175 = vunpack.c.l.b16 %v38
    %v176 = vunpack.c.h.b16 %v38
    %v177 = vunpack.c.l.b16 %v39
    %v178 = vunpack.c.h.b16 %v39
    %v179 = vunpack.c.l.b16 %v40
    %v180 = vunpack.c.h.b16 %v40
    %v181 = vunpack.c.l.b16 %v41
    %v182 = vunpack.c.h.b16 %v41
    %v183 = vunpack.c.l.b16 %v42
    %v184 = vunpack.c.h.b16 %v42
    %v185 = vunpack.c.l.b16 %v43
    %v186 = vunpack.c.h.b16 %v43
    %v187 = vunpack.c.l.b16 %v44
    %v188 = vunpack.c.h.b16 %v44
    %v189 = vunpack.c.l.b16 %v45
    %v190 = vunpack.c.h.b16 %v45
    %v191 = vunpack.c.l.b16 %v46
    %v192 = vunpack.c.h.b16 %v46
    %v193 = vunpack.c.l.b16 %v47
    %v194 = vunpack.c.h.b16 %v47
    %v195 = vunpack.c.l.b16 %v48
    %v196 = vunpack.c.h.b16 %v48
    %v197 = vunpack.c.l.b16 %v49
    %v198 = vunpack.c.h.b16 %v49
    %v199 = vunpack.c.l.b16 %v50
    %v200 = vunpack.c.h.b16 %v50
    %v201 = vunpack.c.l.b16 %v51
    %v202 = vunpack.c.h.b16 %v51
    %v203 = vunpack.c.l.b16 %v52
    %v204 = vunpack.c.h.b16 %v52
    %v205 = vunpack.c.l.b16 %v53
    %v206 = vunpack.c.h.b16 %v53
    %v207 = vunpack.c.l.b16 %v54
    %v208 = vunpack.c.h.b16 %v54
    %v209 = vunpack.c.l.b16 %v55
    %v210 = vunpack.c.h.b16 %v55
    %v211 = vunpack.c.l.b16 %v56
    %v212 = vunpack.c.h.b16 %v56
    %v213 = vunpack.c.l.b16 %v57
    %v214 = vunpack.c.h.b16 %v57
    %v215 = vunpack.c.l.b16 %v58
    %v216 = vunpack.c.h.b16 %v58
    %v217 = vunpack.c.l.b16 %v59
    %v218 = vunpack.c.h.b16 %v59
    %v219 = vunpack.c.l.b16 %v60
    %v220 = vunpack.c.h.b16 %v60
    %v221 = vunpack.c.l.b16 %v61
    %v222 = vunpack.c.h.b16 %v61
    %v223 = vunpack.c.l.b16 %v62
    %v224 = vunpack.c.h.b16 %v62
    %v225 = vunpack.c.l.b16 %v63
    %v226 = vunpack.c.h.b16 %v63
    %v227 = vunpack.c.l.b16 %v64
    %v228 = vunpack.c.h.b16 %v64
    %v229 = vunpack.c.l.b16 %v65
    %v230 = vunpack.c.h.b16 %v65
    %v231 = vunpack.c.l.b16 %v66
    %v232 = vunpack.c.h.b16 %v66
    %v233 = vunpack.c.l.b16 %v67
    %v234 = vunpack.c.h.b16 %v67
    %v235 = vunpack.c.l.b16 %v68
    %v236 = vunpack.c.h.b16 %v68
    %v237 = vunpack.c.l.b16 %v69
    %v238 = vunpack.c.h.b16 %v69
    %v239 = vunpack.c.l.b16 %v70
    %v240 = vunpack.c.h.b16 %v70
    %v241 = vunpack.c.l.b16 %v71
    %v242 = vunpack.c.h.b16 %v71
    %v243 = vunpack.c.l.b16 %v72
    %v244 = vunpack.c.h.b16 %v72
    %v245 = vunpack.c.l.b16 %v73
    %v246 = vunpack.c.h.b16 %v73
    %v247 = vunpack.c.l.b16 %v74
    %v248 = vunpack.c.h.b16 %v74
    %v249 = vunpack.c.l.b16 %v75
    %v250 = vunpack.c.h.b16 %v75
    %v251 = vunpack.c.l.b16 %v76
    %v252 = vunpack.c.h.b16 %v76
    %v253 = vunpack.c.l.b16 %v77
    %v254 = vunpack.c.h.b16 %v77
    %v255 = vunpack.c.l.b16 %v78
    %v256 = vunpack.c.h.b16 %v78
    %v257 = vunpack.c.l.b16 %v79
    %v258 = vunpack.c.h.b16 %v79
    %v259 = vunpack.c.l.b16 %v80
    %v260 = vunpack.c.h.b16 %v80
    %v261 = vunpack.c.l.b16 %v81
    %v262 = vunpack.c.h.b16 %v81
    %v263 = vunpack.c.l.b16 %v82
    %v264 = vunpack.c.h.b16 %v82
    %v265 = vunpack.c.l.b16 %v83
    %v266 = vunpack.c.h.b16 %v83
    %v267 = vunpack.c.l.b16 %v84
    %v268 = vunpack.c.h.b16 %v84
    %v269 = vunpack.c.l.b16 %v85
    %v270 = vunpack.c.h.b16 %v85
    %v271 = vunpack.c.l.b16 %v86
    %v272 = vunpack.c.h.b16 %v86
    %v273 = vunpack.c.l.b16 %v87
    %v274 = vunpack.c.h.b16 %v87
    %v275 = vunpack.c.l.b16 %v88
    %v276 = vunpack.c.h.b16 %v88
    %v277 = vunpack.c.l.b16 %v89
    %v278 = vunpack.c.h.b16 %v89
    %v279 = vunpack.c.l.b16 %v90
    %v280 = vunpack.c.h.b16 %v90
    %v281 = vunpack.c.l.b16 %v91
    %v282 = vunpack.c.h.b16 %v91
    %v283 = vunpack.c.l.b16 %v92
    %v284 = vunpack.c.h.b16 %v92
    %v285 = vpack.c.b16 %v189, %v157
    %v286 = vpack.c.b16 %v190, %v158
    %v287 = vpack.c.b16 %v191, %v159
    %v288 = vpack.c.b16 %v192, %v160
    %v289 = vpack.c.b16 %v193, %v161
    %v290 = vpack.c.b16 %v194, %v162
    %v291 = vpack.c.b16 %v195, %v163
    %v292 = vpack.c.b16 %v196, %v164
    %v293 = vpack.c.b16 %v197, %v165
    %v294 = vpack.c.b16 %v198, %v166
    %v295 = vpack.c.b16 %v199, %v167
    %v296 = vpack.c.b16 %v200, %v168
    %v297 = vpack.c.b16 %v201, %v169
    %v298 = vpack.c.b16 %v202, %v170
    %v299 = vpack.c.b16 %v203, %v171
    %v300 = vpack.c.b16 %v204, %v172
    %v301 = vpack.c.b16 %v205, %v173
    %v302 = vpack.c.b16 %v206, %v174
    %v303 = vpack.c.b16 %v207, %v175
    %v304 = vpack.c.b16 %v208, %v176
    %v305 = vpack.c.b16 %v209, %v177
    %v306 = vpack.c.b16 %v210, %v178
    %v307 = vpack.c.b16 %v211, %v179
    %v308 = vpack.c.b16 %v212, %v180
    %v309 = vpack.c.b16 %v213, %v181
    %v310 = vpack.c.b16 %v214, %v182
    %v311 = vpack.c.b16 %v215, %v183
    %v312 = vpack.c.b16 %v216, %v184
    %v313 = vpack.c.b16 %v217, %v185
    %v314 = vpack.c.b16 %v218, %v186
    %v315 = vpack.c.b16 %v219, %v187
    %v316 = vpack.c.b16 %v220, %v188
    %v317 = vpack.c.b16 %v253, %v221
    %v318 = vpack.c.b16 %v254, %v222
    %v319 = vpack.c.b16 %v255, %v223
    %v320 = vpack.c.b16 %v256, %v224
    %v321 = vpack.c.b16 %v257, %v225
    %v322 = vpack.c.b16 %v258, %v226
    %v323 = vpack.c.b16 %v259, %v227
    %v324 = vpack.c.b16 %v260, %v228
    %v325 = vpack.c.b16 %v261, %v229
    %v326 = vpack.c.b16 %v262, %v230
    %v327 = vpack.c.b16 %v263, %v231
    %v328 = vpack.c.b16 %v264, %v232
    %v329 = vpack.c.b16 %v265, %v233
    %v330 = vpack.c.b16 %v266, %v234
    %v331 = vpack.c.b16 %v267, %v235
    %v332 = vpack.c.b16 %v268, %v236
    %v333 = vpack.c.b16 %v269, %v237
    %v334 = vpack.c.b16 %v270, %v238
    %v335 = vpack.c.b16 %v271, %v239
    %v336 = vpack.c.b16 %v272, %v240
    %v337 = vpack.c.b16 %v273, %v241
    %v338 = vpack.c.b16 %v274, %v242
    %v339 = vpack.c.b16 %v275, %v243
    %v340 = vpack.c.b16 %v276, %v244
    %v341 = vpack.c.b16 %v277, %v245
    %v342 = vpack.c.b16 %v278, %v246
    %v343 = vpack.c.b16 %v279, %v247
    %v344 = vpack.c.b16 %v280, %v248
    %v345 = vpack.c.b16 %v281, %v249
    %v346 = vpack.c.b16 %v282, %v250
    %v347 = vpack.c.b16 %v283, %v251
    %v348 = vpack.c.b16 %v284, %v252
    %vm413 = vcmask 261120
    %v415 = vsel %vm413, %v28, 0
    %417 = vmatpush.bf16.msra.mxu0 0
    %418 = vmatpush.bf16.msra.mxu0 0
    %419 = vmatpush.bf16.msra.mxu0 0
    %420 = vmatpush.bf16.msra.mxu0 0
    %421 = vmatpush.bf16.msra.mxu0 0
    %422 = vmatpush.bf16.msra.mxu0 0
    %423 = vmatpush.bf16.msra.mxu0 %v317
    %424 = vmatpush.bf16.msra.mxu0 %v285
    %425 = vmatmul.bf16.gmra.mxu0 %v415
    %v426 = vpop.f32.mrf.mxu0
    %v427 = vadd.f32 0.0, %v426
    %v428 = vpop.f32.mrf.mxu0
    %429 = vdwg.mxu0
    %430 = vmatpush.bf16.msra.mxu0 0
    %431 = vmatpush.bf16.msra.mxu0 0
    %432 = vmatpush.bf16.msra.mxu0 0
    %433 = vmatpush.bf16.msra.mxu0 0
    %434 = vmatpush.bf16.msra.mxu0 0
    %435 = vmatpush.bf16.msra.mxu0 0
    %436 = vmatpush.bf16.msra.mxu0 %v318
    %437 = vmatpush.bf16.msra.mxu0 %v286
    %438 = vmatmul.bf16.gmra.mxu0 %v415
    %v439 = vpop.f32.mrf.mxu0
    %v440 = vadd.f32 0.0, %v439
    %v441 = vpop.f32.mrf.mxu0
    %442 = vdwg.mxu0
    %443 = vmatpush.bf16.msra.mxu0 0
    %444 = vmatpush.bf16.msra.mxu0 0
    %445 = vmatpush.bf16.msra.mxu0 0
    %446 = vmatpush.bf16.msra.mxu0 0
    %447 = vmatpush.bf16.msra.mxu0 0
    %448 = vmatpush.bf16.msra.mxu0 0
    %449 = vmatpush.bf16.msra.mxu0 %v319
    %450 = vmatpush.bf16.msra.mxu0 %v287
    %451 = vmatmul.bf16.gmra.mxu0 %v415
    %v452 = vpop.f32.mrf.mxu0
    %v453 = vadd.f32 0.0, %v452
    %v454 = vpop.f32.mrf.mxu0
    %455 = vdwg.mxu0
    %456 = vmatpush.bf16.msra.mxu0 0
    %457 = vmatpush.bf16.msra.mxu0 0
    %458 = vmatpush.bf16.msra.mxu0 0
    %459 = vmatpush.bf16.msra.mxu0 0
    %460 = vmatpush.bf16.msra.mxu0 0
    %461 = vmatpush.bf16.msra.mxu0 0
    %462 = vmatpush.bf16.msra.mxu0 %v320
    %463 = vmatpush.bf16.msra.mxu0 %v288
    %464 = vmatmul.bf16.gmra.mxu0 %v415
    %v465 = vpop.f32.mrf.mxu0
    %v466 = vadd.f32 0.0, %v465
    %v467 = vpop.f32.mrf.mxu0
    %468 = vdwg.mxu0
    %469 = vmatpush.bf16.msra.mxu0 0
    %470 = vmatpush.bf16.msra.mxu0 0
    %471 = vmatpush.bf16.msra.mxu0 0
    %472 = vmatpush.bf16.msra.mxu0 0
    %473 = vmatpush.bf16.msra.mxu0 0
    %474 = vmatpush.bf16.msra.mxu0 0
    %475 = vmatpush.bf16.msra.mxu0 %v321
    %476 = vmatpush.bf16.msra.mxu0 %v289
    %477 = vmatmul.bf16.gmra.mxu0 %v415
    %v478 = vpop.f32.mrf.mxu0
    %v479 = vadd.f32 0.0, %v478
    %v480 = vpop.f32.mrf.mxu0
    %481 = vdwg.mxu0
    %482 = vmatpush.bf16.msra.mxu0 0
    %483 = vmatpush.bf16.msra.mxu0 0
    %484 = vmatpush.bf16.msra.mxu0 0
    %485 = vmatpush.bf16.msra.mxu0 0
    %486 = vmatpush.bf16.msra.mxu0 0
    %487 = vmatpush.bf16.msra.mxu0 0
    %488 = vmatpush.bf16.msra.mxu0 %v322
    %489 = vmatpush.bf16.msra.mxu0 %v290
    %490 = vmatmul.bf16.gmra.mxu0 %v415
    %v491 = vpop.f32.mrf.mxu0
    %v492 = vadd.f32 0.0, %v491
    %v493 = vpop.f32.mrf.mxu0
    %494 = vdwg.mxu0
    %495 = vmatpush.bf16.msra.mxu0 0
    %496 = vmatpush.bf16.msra.mxu0 0
    %497 = vmatpush.bf16.msra.mxu0 0
    %498 = vmatpush.bf16.msra.mxu0 0
    %499 = vmatpush.bf16.msra.mxu0 0
    %500 = vmatpush.bf16.msra.mxu0 0
    %501 = vmatpush.bf16.msra.mxu0 %v323
    %502 = vmatpush.bf16.msra.mxu0 %v291
    %503 = vmatmul.bf16.gmra.mxu0 %v415
    %v504 = vpop.f32.mrf.mxu0
    %v505 = vadd.f32 0.0, %v504
    %v506 = vpop.f32.mrf.mxu0
    %507 = vdwg.mxu0
    %508 = vmatpush.bf16.msra.mxu0 0
    %509 = vmatpush.bf16.msra.mxu0 0
    %510 = vmatpush.bf16.msra.mxu0 0
    %511 = vmatpush.bf16.msra.mxu0 0
    %512 = vmatpush.bf16.msra.mxu0 0
    %513 = vmatpush.bf16.msra.mxu0 0
    %514 = vmatpush.bf16.msra.mxu0 %v324
    %515 = vmatpush.bf16.msra.mxu0 %v292
    %516 = vmatmul.bf16.gmra.mxu0 %v415
    %v517 = vpop.f32.mrf.mxu0
    %v518 = vadd.f32 0.0, %v517
    %v519 = vpop.f32.mrf.mxu0
    %520 = vdwg.mxu0
    %521 = vmatpush.bf16.msra.mxu0 0
    %522 = vmatpush.bf16.msra.mxu0 0
    %523 = vmatpush.bf16.msra.mxu0 0
    %524 = vmatpush.bf16.msra.mxu0 0
    %525 = vmatpush.bf16.msra.mxu0 0
    %526 = vmatpush.bf16.msra.mxu0 0
    %527 = vmatpush.bf16.msra.mxu0 %v325
    %528 = vmatpush.bf16.msra.mxu0 %v293
    %529 = vmatmul.bf16.gmra.mxu0 %v415
    %v530 = vpop.f32.mrf.mxu0
    %v531 = vadd.f32 0.0, %v530
    %v532 = vpop.f32.mrf.mxu0
    %533 = vdwg.mxu0
    %534 = vmatpush.bf16.msra.mxu0 0
    %535 = vmatpush.bf16.msra.mxu0 0
    %536 = vmatpush.bf16.msra.mxu0 0
    %537 = vmatpush.bf16.msra.mxu0 0
    %538 = vmatpush.bf16.msra.mxu0 0
    %539 = vmatpush.bf16.msra.mxu0 0
    %540 = vmatpush.bf16.msra.mxu0 %v326
    %541 = vmatpush.bf16.msra.mxu0 %v294
    %542 = vmatmul.bf16.gmra.mxu0 %v415
    %v543 = vpop.f32.mrf.mxu0
    %v544 = vadd.f32 0.0, %v543
    %v545 = vpop.f32.mrf.mxu0
    %546 = vdwg.mxu0
    %547 = vmatpush.bf16.msra.mxu0 0
    %548 = vmatpush.bf16.msra.mxu0 0
    %549 = vmatpush.bf16.msra.mxu0 0
    %550 = vmatpush.bf16.msra.mxu0 0
    %551 = vmatpush.bf16.msra.mxu0 0
    %552 = vmatpush.bf16.msra.mxu0 0
    %553 = vmatpush.bf16.msra.mxu0 %v327
    %554 = vmatpush.bf16.msra.mxu0 %v295
    %555 = vmatmul.bf16.gmra.mxu0 %v415
    %v556 = vpop.f32.mrf.mxu0
    %v557 = vadd.f32 0.0, %v556
    %v558 = vpop.f32.mrf.mxu0
    %559 = vdwg.mxu0
    %560 = vmatpush.bf16.msra.mxu0 0
    %561 = vmatpush.bf16.msra.mxu0 0
    %562 = vmatpush.bf16.msra.mxu0 0
    %563 = vmatpush.bf16.msra.mxu0 0
    %564 = vmatpush.bf16.msra.mxu0 0
    %565 = vmatpush.bf16.msra.mxu0 0
    %566 = vmatpush.bf16.msra.mxu0 %v328
    %567 = vmatpush.bf16.msra.mxu0 %v296
    %568 = vmatmul.bf16.gmra.mxu0 %v415
    %v569 = vpop.f32.mrf.mxu0
    %v570 = vadd.f32 0.0, %v569
    %v571 = vpop.f32.mrf.mxu0
    %572 = vdwg.mxu0
    %573 = vmatpush.bf16.msra.mxu0 0
    %574 = vmatpush.bf16.msra.mxu0 0
    %575 = vmatpush.bf16.msra.mxu0 0
    %576 = vmatpush.bf16.msra.mxu0 0
    %577 = vmatpush.bf16.msra.mxu0 0
    %578 = vmatpush.bf16.msra.mxu0 0
    %579 = vmatpush.bf16.msra.mxu0 %v329
    %580 = vmatpush.bf16.msra.mxu0 %v297
    %581 = vmatmul.bf16.gmra.mxu0 %v415
    %v582 = vpop.f32.mrf.mxu0
    %v583 = vadd.f32 0.0, %v582
    %v584 = vpop.f32.mrf.mxu0
    %585 = vdwg.mxu0
    %586 = vmatpush.bf16.msra.mxu0 0
    %587 = vmatpush.bf16.msra.mxu0 0
    %588 = vmatpush.bf16.msra.mxu0 0
    %589 = vmatpush.bf16.msra.mxu0 0
    %590 = vmatpush.bf16.msra.mxu0 0
    %591 = vmatpush.bf16.msra.mxu0 0
    %592 = vmatpush.bf16.msra.mxu0 %v330
    %593 = vmatpush.bf16.msra.mxu0 %v298
    %594 = vmatmul.bf16.gmra.mxu0 %v415
    %v595 = vpop.f32.mrf.mxu0
    %v596 = vadd.f32 0.0, %v595
    %v597 = vpop.f32.mrf.mxu0
    %598 = vdwg.mxu0
    %599 = vmatpush.bf16.msra.mxu0 0
    %600 = vmatpush.bf16.msra.mxu0 0
    %601 = vmatpush.bf16.msra.mxu0 0
    %602 = vmatpush.bf16.msra.mxu0 0
    %603 = vmatpush.bf16.msra.mxu0 0
    %604 = vmatpush.bf16.msra.mxu0 0
    %605 = vmatpush.bf16.msra.mxu0 %v331
    %606 = vmatpush.bf16.msra.mxu0 %v299
    %607 = vmatmul.bf16.gmra.mxu0 %v415
    %v608 = vpop.f32.mrf.mxu0
    %v609 = vadd.f32 0.0, %v608
    %v610 = vpop.f32.mrf.mxu0
    %611 = vdwg.mxu0
    %612 = vmatpush.bf16.msra.mxu0 0
    %613 = vmatpush.bf16.msra.mxu0 0
    %614 = vmatpush.bf16.msra.mxu0 0
    %615 = vmatpush.bf16.msra.mxu0 0
    %616 = vmatpush.bf16.msra.mxu0 0
    %617 = vmatpush.bf16.msra.mxu0 0
    %618 = vmatpush.bf16.msra.mxu0 %v332
    %619 = vmatpush.bf16.msra.mxu0 %v300
    %620 = vmatmul.bf16.gmra.mxu0 %v415
    %v621 = vpop.f32.mrf.mxu0
    %v622 = vadd.f32 0.0, %v621
    %v623 = vpop.f32.mrf.mxu0
    %624 = vdwg.mxu0
    %625 = vmatpush.bf16.msra.mxu0 0
    %626 = vmatpush.bf16.msra.mxu0 0
    %627 = vmatpush.bf16.msra.mxu0 0
    %628 = vmatpush.bf16.msra.mxu0 0
    %629 = vmatpush.bf16.msra.mxu0 0
    %630 = vmatpush.bf16.msra.mxu0 0
    %631 = vmatpush.bf16.msra.mxu0 %v333
    %632 = vmatpush.bf16.msra.mxu0 %v301
    %633 = vmatmul.bf16.gmra.mxu0 %v415
    %v634 = vpop.f32.mrf.mxu0
    %v635 = vadd.f32 0.0, %v634
    %v636 = vpop.f32.mrf.mxu0
    %637 = vdwg.mxu0
    %638 = vmatpush.bf16.msra.mxu0 0
    %639 = vmatpush.bf16.msra.mxu0 0
    %640 = vmatpush.bf16.msra.mxu0 0
    %641 = vmatpush.bf16.msra.mxu0 0
    %642 = vmatpush.bf16.msra.mxu0 0
    %643 = vmatpush.bf16.msra.mxu0 0
    %644 = vmatpush.bf16.msra.mxu0 %v334
    %645 = vmatpush.bf16.msra.mxu0 %v302
    %646 = vmatmul.bf16.gmra.mxu0 %v415
    %v647 = vpop.f32.mrf.mxu0
    %v648 = vadd.f32 0.0, %v647
    %v649 = vpop.f32.mrf.mxu0
    %650 = vdwg.mxu0
    %651 = vmatpush.bf16.msra.mxu0 0
    %652 = vmatpush.bf16.msra.mxu0 0
    %653 = vmatpush.bf16.msra.mxu0 0
    %654 = vmatpush.bf16.msra.mxu0 0
    %655 = vmatpush.bf16.msra.mxu0 0
    %656 = vmatpush.bf16.msra.mxu0 0
    %657 = vmatpush.bf16.msra.mxu0 %v335
    %658 = vmatpush.bf16.msra.mxu0 %v303
    %659 = vmatmul.bf16.gmra.mxu0 %v415
    %v660 = vpop.f32.mrf.mxu0
    %v661 = vadd.f32 0.0, %v660
    %v662 = vpop.f32.mrf.mxu0
    %663 = vdwg.mxu0
    %664 = vmatpush.bf16.msra.mxu0 0
    %665 = vmatpush.bf16.msra.mxu0 0
    %666 = vmatpush.bf16.msra.mxu0 0
    %667 = vmatpush.bf16.msra.mxu0 0
    %668 = vmatpush.bf16.msra.mxu0 0
    %669 = vmatpush.bf16.msra.mxu0 0
    %670 = vmatpush.bf16.msra.mxu0 %v336
    %671 = vmatpush.bf16.msra.mxu0 %v304
    %672 = vmatmul.bf16.gmra.mxu0 %v415
    %v673 = vpop.f32.mrf.mxu0
    %v674 = vadd.f32 0.0, %v673
    %v675 = vpop.f32.mrf.mxu0
    %676 = vdwg.mxu0
    %677 = vmatpush.bf16.msra.mxu0 0
    %678 = vmatpush.bf16.msra.mxu0 0
    %679 = vmatpush.bf16.msra.mxu0 0
    %680 = vmatpush.bf16.msra.mxu0 0
    %681 = vmatpush.bf16.msra.mxu0 0
    %682 = vmatpush.bf16.msra.mxu0 0
    %683 = vmatpush.bf16.msra.mxu0 %v337
    %684 = vmatpush.bf16.msra.mxu0 %v305
    %685 = vmatmul.bf16.gmra.mxu0 %v415
    %v686 = vpop.f32.mrf.mxu0
    %v687 = vadd.f32 0.0, %v686
    %v688 = vpop.f32.mrf.mxu0
    %689 = vdwg.mxu0
    %690 = vmatpush.bf16.msra.mxu0 0
    %691 = vmatpush.bf16.msra.mxu0 0
    %692 = vmatpush.bf16.msra.mxu0 0
    %693 = vmatpush.bf16.msra.mxu0 0
    %694 = vmatpush.bf16.msra.mxu0 0
    %695 = vmatpush.bf16.msra.mxu0 0
    %696 = vmatpush.bf16.msra.mxu0 %v338
    %697 = vmatpush.bf16.msra.mxu0 %v306
    %698 = vmatmul.bf16.gmra.mxu0 %v415
    %v699 = vpop.f32.mrf.mxu0
    %v700 = vadd.f32 0.0, %v699
    %v701 = vpop.f32.mrf.mxu0
    %702 = vdwg.mxu0
    %703 = vmatpush.bf16.msra.mxu0 0
    %704 = vmatpush.bf16.msra.mxu0 0
    %705 = vmatpush.bf16.msra.mxu0 0
    %706 = vmatpush.bf16.msra.mxu0 0
    %707 = vmatpush.bf16.msra.mxu0 0
    %708 = vmatpush.bf16.msra.mxu0 0
    %709 = vmatpush.bf16.msra.mxu0 %v339
    %710 = vmatpush.bf16.msra.mxu0 %v307
    %711 = vmatmul.bf16.gmra.mxu0 %v415
    %v712 = vpop.f32.mrf.mxu0
    %v713 = vadd.f32 0.0, %v712
    %v714 = vpop.f32.mrf.mxu0
    %715 = vdwg.mxu0
    %716 = vmatpush.bf16.msra.mxu0 0
    %717 = vmatpush.bf16.msra.mxu0 0
    %718 = vmatpush.bf16.msra.mxu0 0
    %719 = vmatpush.bf16.msra.mxu0 0
    %720 = vmatpush.bf16.msra.mxu0 0
    %721 = vmatpush.bf16.msra.mxu0 0
    %722 = vmatpush.bf16.msra.mxu0 %v340
    %723 = vmatpush.bf16.msra.mxu0 %v308
    %724 = vmatmul.bf16.gmra.mxu0 %v415
    %v725 = vpop.f32.mrf.mxu0
    %v726 = vadd.f32 0.0, %v725
    %v727 = vpop.f32.mrf.mxu0
    %728 = vdwg.mxu0
    %729 = vmatpush.bf16.msra.mxu0 0
    %730 = vmatpush.bf16.msra.mxu0 0
    %731 = vmatpush.bf16.msra.mxu0 0
    %732 = vmatpush.bf16.msra.mxu0 0
    %733 = vmatpush.bf16.msra.mxu0 0
    %734 = vmatpush.bf16.msra.mxu0 0
    %735 = vmatpush.bf16.msra.mxu0 %v341
    %736 = vmatpush.bf16.msra.mxu0 %v309
    %737 = vmatmul.bf16.gmra.mxu0 %v415
    %v738 = vpop.f32.mrf.mxu0
    %v739 = vadd.f32 0.0, %v738
    %v740 = vpop.f32.mrf.mxu0
    %741 = vdwg.mxu0
    %742 = vmatpush.bf16.msra.mxu0 0
    %743 = vmatpush.bf16.msra.mxu0 0
    %744 = vmatpush.bf16.msra.mxu0 0
    %745 = vmatpush.bf16.msra.mxu0 0
    %746 = vmatpush.bf16.msra.mxu0 0
    %747 = vmatpush.bf16.msra.mxu0 0
    %748 = vmatpush.bf16.msra.mxu0 %v342
    %749 = vmatpush.bf16.msra.mxu0 %v310
    %750 = vmatmul.bf16.gmra.mxu0 %v415
    %v751 = vpop.f32.mrf.mxu0
    %v752 = vadd.f32 0.0, %v751
    %v753 = vpop.f32.mrf.mxu0
    %754 = vdwg.mxu0
    %755 = vmatpush.bf16.msra.mxu0 0
    %756 = vmatpush.bf16.msra.mxu0 0
    %757 = vmatpush.bf16.msra.mxu0 0
    %758 = vmatpush.bf16.msra.mxu0 0
    %759 = vmatpush.bf16.msra.mxu0 0
    %760 = vmatpush.bf16.msra.mxu0 0
    %761 = vmatpush.bf16.msra.mxu0 %v343
    %762 = vmatpush.bf16.msra.mxu0 %v311
    %763 = vmatmul.bf16.gmra.mxu0 %v415
    %v764 = vpop.f32.mrf.mxu0
    %v765 = vadd.f32 0.0, %v764
    %v766 = vpop.f32.mrf.mxu0
    %767 = vdwg.mxu0
    %768 = vmatpush.bf16.msra.mxu0 0
    %769 = vmatpush.bf16.msra.mxu0 0
    %770 = vmatpush.bf16.msra.mxu0 0
    %771 = vmatpush.bf16.msra.mxu0 0
    %772 = vmatpush.bf16.msra.mxu0 0
    %773 = vmatpush.bf16.msra.mxu0 0
    %774 = vmatpush.bf16.msra.mxu0 %v344
    %775 = vmatpush.bf16.msra.mxu0 %v312
    %776 = vmatmul.bf16.gmra.mxu0 %v415
    %v777 = vpop.f32.mrf.mxu0
    %v778 = vadd.f32 0.0, %v777
    %v779 = vpop.f32.mrf.mxu0
    %780 = vdwg.mxu0
    %781 = vmatpush.bf16.msra.mxu0 0
    %782 = vmatpush.bf16.msra.mxu0 0
    %783 = vmatpush.bf16.msra.mxu0 0
    %784 = vmatpush.bf16.msra.mxu0 0
    %785 = vmatpush.bf16.msra.mxu0 0
    %786 = vmatpush.bf16.msra.mxu0 0
    %787 = vmatpush.bf16.msra.mxu0 %v345
    %788 = vmatpush.bf16.msra.mxu0 %v313
    %789 = vmatmul.bf16.gmra.mxu0 %v415
    %v790 = vpop.f32.mrf.mxu0
    %v791 = vadd.f32 0.0, %v790
    %v792 = vpop.f32.mrf.mxu0
    %793 = vdwg.mxu0
    %794 = vmatpush.bf16.msra.mxu0 0
    %795 = vmatpush.bf16.msra.mxu0 0
    %796 = vmatpush.bf16.msra.mxu0 0
    %797 = vmatpush.bf16.msra.mxu0 0
    %798 = vmatpush.bf16.msra.mxu0 0
    %799 = vmatpush.bf16.msra.mxu0 0
    %800 = vmatpush.bf16.msra.mxu0 %v346
    %801 = vmatpush.bf16.msra.mxu0 %v314
    %802 = vmatmul.bf16.gmra.mxu0 %v415
    %v803 = vpop.f32.mrf.mxu0
    %v804 = vadd.f32 0.0, %v803
    %v805 = vpop.f32.mrf.mxu0
    %806 = vdwg.mxu0
    %807 = vmatpush.bf16.msra.mxu0 0
    %808 = vmatpush.bf16.msra.mxu0 0
    %809 = vmatpush.bf16.msra.mxu0 0
    %810 = vmatpush.bf16.msra.mxu0 0
    %811 = vmatpush.bf16.msra.mxu0 0
    %812 = vmatpush.bf16.msra.mxu0 0
    %813 = vmatpush.bf16.msra.mxu0 %v347
    %814 = vmatpush.bf16.msra.mxu0 %v315
    %815 = vmatmul.bf16.gmra.mxu0 %v415
    %v816 = vpop.f32.mrf.mxu0
    %v817 = vadd.f32 0.0, %v816
    %v818 = vpop.f32.mrf.mxu0
    %819 = vdwg.mxu0
    %820 = vmatpush.bf16.msra.mxu0 0
    %821 = vmatpush.bf16.msra.mxu0 0
    %822 = vmatpush.bf16.msra.mxu0 0
    %823 = vmatpush.bf16.msra.mxu0 0
    %824 = vmatpush.bf16.msra.mxu0 0
    %825 = vmatpush.bf16.msra.mxu0 0
    %826 = vmatpush.bf16.msra.mxu0 %v348
    %827 = vmatpush.bf16.msra.mxu0 %v316
    %828 = vmatmul.bf16.gmra.mxu0 %v415
    %v829 = vpop.f32.mrf.mxu0
    %v830 = vadd.f32 0.0, %v829
    %v831 = vpop.f32.mrf.mxu0
    %832 = vdwg.mxu0
    %v833 = vpack.c.bf16 %v440, %v427
    %v834 = vpack.c.bf16 %v466, %v453
    %v835 = vpack.c.bf16 %v492, %v479
    %v836 = vpack.c.bf16 %v518, %v505
    %v837 = vpack.c.bf16 %v544, %v531
    %v838 = vpack.c.bf16 %v570, %v557
    %v839 = vpack.c.bf16 %v596, %v583
    %v840 = vpack.c.bf16 %v622, %v609
    %v841 = vpack.c.bf16 %v648, %v635
    %v842 = vpack.c.bf16 %v674, %v661
    %v843 = vpack.c.bf16 %v700, %v687
    %v844 = vpack.c.bf16 %v726, %v713
    %v845 = vpack.c.bf16 %v752, %v739
    %v846 = vpack.c.bf16 %v778, %v765
    %v847 = vpack.c.bf16 %v804, %v791
    %v848 = vpack.c.bf16 %v830, %v817
    %v849 = vld [vmem:[%s3] sm:$0xff]
    %v850 = vld [vmem:[%s3 + $0x8] sm:$0xff]
    %v851 = vld [vmem:[%s3 + $0x10] sm:$0xff]
    %v852 = vld [vmem:[%s3 + $0x18] sm:$0xff]
    %854 = vst [vmem:[#allocation1] ss:$9 sm:$0xff] %v849
    %v855 = vld [vmem:[#allocation1] sm:$0xff]
    %v856 = vld [vmem:[#allocation1 + $0x9] sm:$0xff]
    %v857 = vld [vmem:[#allocation1 + $0x12] sm:$0xff]
    %v858 = vld [vmem:[#allocation1 + $0x1b] sm:$0xff]
    %v859 = vld [vmem:[#allocation1 + $0x24] sm:$0xff]
    %v860 = vld [vmem:[#allocation1 + $0x2d] sm:$0xff]
    %v861 = vld [vmem:[#allocation1 + $0x36] sm:$0xff]
    %v862 = vld [vmem:[#allocation1 + $0x3f] sm:$0xff]
    %864 = vst [vmem:[#allocation1] ss:$9 sm:$0xff] %v850
    %v865 = vld [vmem:[#allocation1] sm:$0xff]
    %v866 = vld [vmem:[#allocation1 + $0x9] sm:$0xff]
    %v867 = vld [vmem:[#allocation1 + $0x12] sm:$0xff]
    %v868 = vld [vmem:[#allocation1 + $0x1b] sm:$0xff]
    %v869 = vld [vmem:[#allocation1 + $0x24] sm:$0xff]
    %v870 = vld [vmem:[#allocation1 + $0x2d] sm:$0xff]
    %v871 = vld [vmem:[#allocation1 + $0x36] sm:$0xff]
    %v872 = vld [vmem:[#allocation1 + $0x3f] sm:$0xff]
    %874 = vst [vmem:[#allocation1] ss:$9 sm:$0xff] %v851
    %v875 = vld [vmem:[#allocation1] sm:$0xff]
    %v876 = vld [vmem:[#allocation1 + $0x9] sm:$0xff]
    %v877 = vld [vmem:[#allocation1 + $0x12] sm:$0xff]
    %v878 = vld [vmem:[#allocation1 + $0x1b] sm:$0xff]
    %v879 = vld [vmem:[#allocation1 + $0x24] sm:$0xff]
    %v880 = vld [vmem:[#allocation1 + $0x2d] sm:$0xff]
    %v881 = vld [vmem:[#allocation1 + $0x36] sm:$0xff]
    %v882 = vld [vmem:[#allocation1 + $0x3f] sm:$0xff]
    %884 = vst [vmem:[#allocation1] ss:$9 sm:$0xff] %v852
    %v885 = vld [vmem:[#allocation1] sm:$0xff]
    %v886 = vld [vmem:[#allocation1 + $0x9] sm:$0xff]
    %v887 = vld [vmem:[#allocation1 + $0x12] sm:$0xff]
    %v888 = vld [vmem:[#allocation1 + $0x1b] sm:$0xff]
    %v889 = vld [vmem:[#allocation1 + $0x24] sm:$0xff]
    %v890 = vld [vmem:[#allocation1 + $0x2d] sm:$0xff]
    %v891 = vld [vmem:[#allocation1 + $0x36] sm:$0xff]
    %v892 = vld [vmem:[#allocation1 + $0x3f] sm:$0xff]
    %v893 = vpack.i.b16 %v855, %v855
    %v895 = vperm.slane %v893, 0
    %v896 = vpack.i.b16 %v856, %v856
    %v898 = vperm.slane %v896, 0
    %v899 = vpack.i.b16 %v857, %v857
    %v901 = vperm.slane %v899, 0
    %v902 = vpack.i.b16 %v858, %v858
    %v904 = vperm.slane %v902, 0
    %v905 = vpack.i.b16 %v859, %v859
    %v907 = vperm.slane %v905, 0
    %v908 = vpack.i.b16 %v860, %v860
    %v910 = vperm.slane %v908, 0
    %v911 = vpack.i.b16 %v861, %v861
    %v913 = vperm.slane %v911, 0
    %v914 = vpack.i.b16 %v862, %v862
    %v916 = vperm.slane %v914, 0
    %v917 = vpack.i.b16 %v865, %v865
    %v919 = vperm.slane %v917, 0
    %v920 = vpack.i.b16 %v866, %v866
    %v922 = vperm.slane %v920, 0
    %v923 = vpack.i.b16 %v867, %v867
    %v925 = vperm.slane %v923, 0
    %v926 = vpack.i.b16 %v868, %v868
    %v928 = vperm.slane %v926, 0
    %v929 = vpack.i.b16 %v869, %v869
    %v931 = vperm.slane %v929, 0
    %v932 = vpack.i.b16 %v870, %v870
    %v934 = vperm.slane %v932, 0
    %v935 = vpack.i.b16 %v871, %v871
    %v937 = vperm.slane %v935, 0
    %v938 = vpack.i.b16 %v872, %v872
    %v940 = vperm.slane %v938, 0
    %v941 = vpack.i.b16 %v875, %v875
    %v943 = vperm.slane %v941, 0
    %v944 = vpack.i.b16 %v876, %v876
    %v946 = vperm.slane %v944, 0
    %v947 = vpack.i.b16 %v877, %v877
    %v949 = vperm.slane %v947, 0
    %v950 = vpack.i.b16 %v878, %v878
    %v952 = vperm.slane %v950, 0
    %v953 = vpack.i.b16 %v879, %v879
    %v955 = vperm.slane %v953, 0
    %v956 = vpack.i.b16 %v880, %v880
    %v958 = vperm.slane %v956, 0
    %v959 = vpack.i.b16 %v881, %v881
    %v961 = vperm.slane %v959, 0
    %v962 = vpack.i.b16 %v882, %v882
    %v964 = vperm.slane %v962, 0
    %v965 = vpack.i.b16 %v885, %v885
    %v967 = vperm.slane %v965, 0
    %v968 = vpack.i.b16 %v886, %v886
    %v970 = vperm.slane %v968, 0
    %v971 = vpack.i.b16 %v887, %v887
    %v973 = vperm.slane %v971, 0
    %v974 = vpack.i.b16 %v888, %v888
    %v976 = vperm.slane %v974, 0
    %v977 = vpack.i.b16 %v889, %v889
    %v979 = vperm.slane %v977, 0
    %v980 = vpack.i.b16 %v890, %v890
    %v982 = vperm.slane %v980, 0
    %v983 = vpack.i.b16 %v891, %v891
    %v985 = vperm.slane %v983, 0
    %v986 = vpack.i.b16 %v892, %v892
    %v988 = vperm.slane %v986, 0
    %v989 = vunpack.c.l.bf16 %v833
    %v990 = vunpack.c.h.bf16 %v833
    %v991 = vunpack.c.l.bf16 %v834
    %v992 = vunpack.c.h.bf16 %v834
    %v993 = vunpack.c.l.bf16 %v835
    %v994 = vunpack.c.h.bf16 %v835
    %v995 = vunpack.c.l.bf16 %v836
    %v996 = vunpack.c.h.bf16 %v836
    %v997 = vunpack.c.l.bf16 %v837
    %v998 = vunpack.c.h.bf16 %v837
    %v999 = vunpack.c.l.bf16 %v838
    %v1000 = vunpack.c.h.bf16 %v838
    %v1001 = vunpack.c.l.bf16 %v839
    %v1002 = vunpack.c.h.bf16 %v839
    %v1003 = vunpack.c.l.bf16 %v840
    %v1004 = vunpack.c.h.bf16 %v840
    %v1005 = vunpack.c.l.bf16 %v841
    %v1006 = vunpack.c.h.bf16 %v841
    %v1007 = vunpack.c.l.bf16 %v842
    %v1008 = vunpack.c.h.bf16 %v842
    %v1009 = vunpack.c.l.bf16 %v843
    %v1010 = vunpack.c.h.bf16 %v843
    %v1011 = vunpack.c.l.bf16 %v844
    %v1012 = vunpack.c.h.bf16 %v844
    %v1013 = vunpack.c.l.bf16 %v845
    %v1014 = vunpack.c.h.bf16 %v845
    %v1015 = vunpack.c.l.bf16 %v846
    %v1016 = vunpack.c.h.bf16 %v846
    %v1017 = vunpack.c.l.bf16 %v847
    %v1018 = vunpack.c.h.bf16 %v847
    %v1019 = vunpack.c.l.bf16 %v848
    %v1020 = vunpack.c.h.bf16 %v848
    %v1021 = vunpack.c.l.bf16 %v895
    %v1022 = vunpack.c.l.bf16 %v898
    %v1023 = vunpack.c.l.bf16 %v901
    %v1024 = vunpack.c.l.bf16 %v904
    %v1025 = vunpack.c.l.bf16 %v907
    %v1026 = vunpack.c.l.bf16 %v910
    %v1027 = vunpack.c.l.bf16 %v913
    %v1028 = vunpack.c.l.bf16 %v916
    %v1029 = vunpack.c.l.bf16 %v919
    %v1030 = vunpack.c.l.bf16 %v922
    %v1031 = vunpack.c.l.bf16 %v925
    %v1032 = vunpack.c.l.bf16 %v928
    %v1033 = vunpack.c.l.bf16 %v931
    %v1034 = vunpack.c.l.bf16 %v934
    %v1035 = vunpack.c.l.bf16 %v937
    %v1036 = vunpack.c.l.bf16 %v940
    %v1037 = vunpack.c.l.bf16 %v943
    %v1038 = vunpack.c.l.bf16 %v946
    %v1039 = vunpack.c.l.bf16 %v949
    %v1040 = vunpack.c.l.bf16 %v952
    %v1041 = vunpack.c.l.bf16 %v955
    %v1042 = vunpack.c.l.bf16 %v958
    %v1043 = vunpack.c.l.bf16 %v961
    %v1044 = vunpack.c.l.bf16 %v964
    %v1045 = vunpack.c.l.bf16 %v967
    %v1046 = vunpack.c.l.bf16 %v970
    %v1047 = vunpack.c.l.bf16 %v973
    %v1048 = vunpack.c.l.bf16 %v976
    %v1049 = vunpack.c.l.bf16 %v979
    %v1050 = vunpack.c.l.bf16 %v982
    %v1051 = vunpack.c.l.bf16 %v985
    %v1052 = vunpack.c.l.bf16 %v988
    %v1053 = vadd.f32 %v989, %v1021
    %v1054 = vadd.f32 %v990, %v1022
    %v1055 = vadd.f32 %v991, %v1023
    %v1056 = vadd.f32 %v992, %v1024
    %v1057 = vadd.f32 %v993, %v1025
    %v1058 = vadd.f32 %v994, %v1026
    %v1059 = vadd.f32 %v995, %v1027
    %v1060 = vadd.f32 %v996, %v1028
    %v1061 = vadd.f32 %v997, %v1029
    %v1062 = vadd.f32 %v998, %v1030
    %v1063 = vadd.f32 %v999, %v1031
    %v1064 = vadd.f32 %v1000, %v1032
    %v1065 = vadd.f32 %v1001, %v1033
    %v1066 = vadd.f32 %v1002, %v1034
    %v1067 = vadd.f32 %v1003, %v1035
    %v1068 = vadd.f32 %v1004, %v1036
    %v1069 = vadd.f32 %v1005, %v1037
    %v1070 = vadd.f32 %v1006, %v1038
    %v1071 = vadd.f32 %v1007, %v1039
    %v1072 = vadd.f32 %v1008, %v1040
    %v1073 = vadd.f32 %v1009, %v1041
    %v1074 = vadd.f32 %v1010, %v1042
    %v1075 = vadd.f32 %v1011, %v1043
    %v1076 = vadd.f32 %v1012, %v1044
    %v1077 = vadd.f32 %v1013, %v1045
    %v1078 = vadd.f32 %v1014, %v1046
    %v1079 = vadd.f32 %v1015, %v1047
    %v1080 = vadd.f32 %v1016, %v1048
    %v1081 = vadd.f32 %v1017, %v1049
    %v1082 = vadd.f32 %v1018, %v1050
    %v1083 = vadd.f32 %v1019, %v1051
    %v1084 = vadd.f32 %v1020, %v1052
    %v1085 = vpack.c.bf16 %v1054, %v1053
    %v1086 = vpack.c.bf16 %v1056, %v1055
    %v1087 = vpack.c.bf16 %v1058, %v1057
    %v1088 = vpack.c.bf16 %v1060, %v1059
    %v1089 = vpack.c.bf16 %v1062, %v1061
    %v1090 = vpack.c.bf16 %v1064, %v1063
    %v1091 = vpack.c.bf16 %v1066, %v1065
    %v1092 = vpack.c.bf16 %v1068, %v1067
    %v1093 = vpack.c.bf16 %v1070, %v1069
    %v1094 = vpack.c.bf16 %v1072, %v1071
    %v1095 = vpack.c.bf16 %v1074, %v1073
    %v1096 = vpack.c.bf16 %v1076, %v1075
    %v1097 = vpack.c.bf16 %v1078, %v1077
    %v1098 = vpack.c.bf16 %v1080, %v1079
    %v1099 = vpack.c.bf16 %v1082, %v1081
    %v1100 = vpack.c.bf16 %v1084, %v1083
    %v1101 = vunpack.c.l.bf16 %v1085
    %v1102 = vunpack.c.h.bf16 %v1085
    %v1103 = vunpack.c.l.bf16 %v1086
    %v1104 = vunpack.c.h.bf16 %v1086
    %v1105 = vunpack.c.l.bf16 %v1087
    %v1106 = vunpack.c.h.bf16 %v1087
    %v1107 = vunpack.c.l.bf16 %v1088
    %v1108 = vunpack.c.h.bf16 %v1088
    %v1109 = vunpack.c.l.bf16 %v1089
    %v1110 = vunpack.c.h.bf16 %v1089
    %v1111 = vunpack.c.l.bf16 %v1090
    %v1112 = vunpack.c.h.bf16 %v1090
    %v1113 = vunpack.c.l.bf16 %v1091
    %v1114 = vunpack.c.h.bf16 %v1091
    %v1115 = vunpack.c.l.bf16 %v1092
    %v1116 = vunpack.c.h.bf16 %v1092
    %v1117 = vunpack.c.l.bf16 %v1093
    %v1118 = vunpack.c.h.bf16 %v1093
    %v1119 = vunpack.c.l.bf16 %v1094
    %v1120 = vunpack.c.h.bf16 %v1094
    %v1121 = vunpack.c.l.bf16 %v1095
    %v1122 = vunpack.c.h.bf16 %v1095
    %v1123 = vunpack.c.l.bf16 %v1096
    %v1124 = vunpack.c.h.bf16 %v1096
    %v1125 = vunpack.c.l.bf16 %v1097
    %v1126 = vunpack.c.h.bf16 %v1097
    %v1127 = vunpack.c.l.bf16 %v1098
    %v1128 = vunpack.c.h.bf16 %v1098
    %v1129 = vunpack.c.l.bf16 %v1099
    %v1130 = vunpack.c.h.bf16 %v1099
    %v1131 = vunpack.c.l.bf16 %v1100
    %v1132 = vunpack.c.h.bf16 %v1100
    %v1133 = vmax.f32 %v1101, 0.0
    %v1134 = vmax.f32 %v1102, 0.0
    %v1135 = vmax.f32 %v1103, 0.0
    %v1136 = vmax.f32 %v1104, 0.0
    %v1137 = vmax.f32 %v1105, 0.0
    %v1138 = vmax.f32 %v1106, 0.0
    %v1139 = vmax.f32 %v1107, 0.0
    %v1140 = vmax.f32 %v1108, 0.0
    %v1141 = vmax.f32 %v1109, 0.0
    %v1142 = vmax.f32 %v1110, 0.0
    %v1143 = vmax.f32 %v1111, 0.0
    %v1144 = vmax.f32 %v1112, 0.0
    %v1145 = vmax.f32 %v1113, 0.0
    %v1146 = vmax.f32 %v1114, 0.0
    %v1147 = vmax.f32 %v1115, 0.0
    %v1148 = vmax.f32 %v1116, 0.0
    %v1149 = vmax.f32 %v1117, 0.0
    %v1150 = vmax.f32 %v1118, 0.0
    %v1151 = vmax.f32 %v1119, 0.0
    %v1152 = vmax.f32 %v1120, 0.0
    %v1153 = vmax.f32 %v1121, 0.0
    %v1154 = vmax.f32 %v1122, 0.0
    %v1155 = vmax.f32 %v1123, 0.0
    %v1156 = vmax.f32 %v1124, 0.0
    %v1157 = vmax.f32 %v1125, 0.0
    %v1158 = vmax.f32 %v1126, 0.0
    %v1159 = vmax.f32 %v1127, 0.0
    %v1160 = vmax.f32 %v1128, 0.0
    %v1161 = vmax.f32 %v1129, 0.0
    %v1162 = vmax.f32 %v1130, 0.0
    %v1163 = vmax.f32 %v1131, 0.0
    %v1164 = vmax.f32 %v1132, 0.0
    %v1165 = vpack.c.bf16 %v1133, %v1133
    %v1166 = vpack.c.bf16 %v1134, %v1134
    %v1167 = vpack.c.bf16 %v1135, %v1135
    %v1168 = vpack.c.bf16 %v1136, %v1136
    %v1169 = vpack.c.bf16 %v1137, %v1137
    %v1170 = vpack.c.bf16 %v1138, %v1138
    %v1171 = vpack.c.bf16 %v1139, %v1139
    %v1172 = vpack.c.bf16 %v1140, %v1140
    %v1173 = vpack.c.bf16 %v1141, %v1141
    %v1174 = vpack.c.bf16 %v1142, %v1142
    %v1175 = vpack.c.bf16 %v1143, %v1143
    %v1176 = vpack.c.bf16 %v1144, %v1144
    %v1177 = vpack.c.bf16 %v1145, %v1145
    %v1178 = vpack.c.bf16 %v1146, %v1146
    %v1179 = vpack.c.bf16 %v1147, %v1147
    %v1180 = vpack.c.bf16 %v1148, %v1148
    %v1181 = vpack.c.bf16 %v1149, %v1149
    %v1182 = vpack.c.bf16 %v1150, %v1150
    %v1183 = vpack.c.bf16 %v1151, %v1151
    %v1184 = vpack.c.bf16 %v1152, %v1152
    %v1185 = vpack.c.bf16 %v1153, %v1153
    %v1186 = vpack.c.bf16 %v1154, %v1154
    %v1187 = vpack.c.bf16 %v1155, %v1155
    %v1188 = vpack.c.bf16 %v1156, %v1156
    %v1189 = vpack.c.bf16 %v1157, %v1157
    %v1190 = vpack.c.bf16 %v1158, %v1158
    %v1191 = vpack.c.bf16 %v1159, %v1159
    %v1192 = vpack.c.bf16 %v1160, %v1160
    %v1193 = vpack.c.bf16 %v1161, %v1161
    %v1194 = vpack.c.bf16 %v1162, %v1162
    %v1195 = vpack.c.bf16 %v1163, %v1163
    %v1196 = vpack.c.bf16 %v1164, %v1164
    %v1197 = vld [vmem:[%s4] sm:$0xf]
    %v1198 = vld [vmem:[%s4 + $0x4] sm:$0xf]
    %v1199 = vld [vmem:[%s4 + $0x8] sm:$0xf]
    %v1200 = vld [vmem:[%s4 + $0xc] sm:$0xf]
    %v1201 = vld [vmem:[%s4 + $0x10] sm:$0xf]
    %v1202 = vld [vmem:[%s4 + $0x14] sm:$0xf]
    %v1203 = vld [vmem:[%s4 + $0x18] sm:$0xf]
    %v1204 = vld [vmem:[%s4 + $0x1c] sm:$0xf]
    %v1205 = vld [vmem:[%s4 + $0x20] sm:$0xf]
    %v1206 = vld [vmem:[%s4 + $0x24] sm:$0xf]
    %v1207 = vld [vmem:[%s4 + $0x28] sm:$0xf]
    %v1208 = vld [vmem:[%s4 + $0x2c] sm:$0xf]
    %v1209 = vld [vmem:[%s4 + $0x30] sm:$0xf]
    %v1210 = vld [vmem:[%s4 + $0x34] sm:$0xf]
    %v1211 = vld [vmem:[%s4 + $0x38] sm:$0xf]
    %v1212 = vld [vmem:[%s4 + $0x3c] sm:$0xf]
    %v1213 = vld [vmem:[%s4 + $0x40] sm:$0xf]
    %v1214 = vld [vmem:[%s4 + $0x44] sm:$0xf]
    %v1215 = vld [vmem:[%s4 + $0x48] sm:$0xf]
    %v1216 = vld [vmem:[%s4 + $0x4c] sm:$0xf]
    %v1217 = vld [vmem:[%s4 + $0x50] sm:$0xf]
    %v1218 = vld [vmem:[%s4 + $0x54] sm:$0xf]
    %v1219 = vld [vmem:[%s4 + $0x58] sm:$0xf]
    %v1220 = vld [vmem:[%s4 + $0x5c] sm:$0xf]
    %v1221 = vld [vmem:[%s4 + $0x60] sm:$0xf]
    %v1222 = vld [vmem:[%s4 + $0x64] sm:$0xf]
    %v1223 = vld [vmem:[%s4 + $0x68] sm:$0xf]
    %v1224 = vld [vmem:[%s4 + $0x6c] sm:$0xf]
    %v1225 = vld [vmem:[%s4 + $0x70] sm:$0xf]
    %v1226 = vld [vmem:[%s4 + $0x74] sm:$0xf]
    %v1227 = vld [vmem:[%s4 + $0x78] sm:$0xf]
    %v1228 = vld [vmem:[%s4 + $0x7c] sm:$0xf]
    %v1229 = vld [vmem:[%s4 + $0x80] sm:$0xf]
    %v1230 = vld [vmem:[%s4 + $0x84] sm:$0xf]
    %v1231 = vld [vmem:[%s4 + $0x88] sm:$0xf]
    %v1232 = vld [vmem:[%s4 + $0x8c] sm:$0xf]
    %v1233 = vld [vmem:[%s4 + $0x90] sm:$0xf]
    %v1234 = vld [vmem:[%s4 + $0x94] sm:$0xf]
    %v1235 = vld [vmem:[%s4 + $0x98] sm:$0xf]
    %v1236 = vld [vmem:[%s4 + $0x9c] sm:$0xf]
    %v1237 = vld [vmem:[%s4 + $0xa0] sm:$0xf]
    %v1238 = vld [vmem:[%s4 + $0xa4] sm:$0xf]
    %v1239 = vld [vmem:[%s4 + $0xa8] sm:$0xf]
    %v1240 = vld [vmem:[%s4 + $0xac] sm:$0xf]
    %v1241 = vld [vmem:[%s4 + $0xb0] sm:$0xf]
    %v1242 = vld [vmem:[%s4 + $0xb4] sm:$0xf]
    %v1243 = vld [vmem:[%s4 + $0xb8] sm:$0xf]
    %v1244 = vld [vmem:[%s4 + $0xbc] sm:$0xf]
    %v1245 = vld [vmem:[%s4 + $0xc0] sm:$0xf]
    %v1246 = vld [vmem:[%s4 + $0xc4] sm:$0xf]
    %v1247 = vld [vmem:[%s4 + $0xc8] sm:$0xf]
    %v1248 = vld [vmem:[%s4 + $0xcc] sm:$0xf]
    %v1249 = vld [vmem:[%s4 + $0xd0] sm:$0xf]
    %v1250 = vld [vmem:[%s4 + $0xd4] sm:$0xf]
    %v1251 = vld [vmem:[%s4 + $0xd8] sm:$0xf]
    %v1252 = vld [vmem:[%s4 + $0xdc] sm:$0xf]
    %v1253 = vld [vmem:[%s4 + $0xe0] sm:$0xf]
    %v1254 = vld [vmem:[%s4 + $0xe4] sm:$0xf]
    %v1255 = vld [vmem:[%s4 + $0xe8] sm:$0xf]
    %v1256 = vld [vmem:[%s4 + $0xec] sm:$0xf]
    %v1257 = vld [vmem:[%s4 + $0xf0] sm:$0xf]
    %v1258 = vld [vmem:[%s4 + $0xf4] sm:$0xf]
    %v1259 = vld [vmem:[%s4 + $0xf8] sm:$0xf]
    %v1260 = vld [vmem:[%s4 + $0xfc] sm:$0xf]
    %v1261 = vld [vmem:[%s4 + $0x100] sm:$0xf]
    %v1262 = vld [vmem:[%s4 + $0x104] sm:$0xf]
    %v1263 = vld [vmem:[%s4 + $0x108] sm:$0xf]
    %v1264 = vld [vmem:[%s4 + $0x10c] sm:$0xf]
    %v1265 = vld [vmem:[%s4 + $0x110] sm:$0xf]
    %v1266 = vld [vmem:[%s4 + $0x114] sm:$0xf]
    %v1267 = vld [vmem:[%s4 + $0x118] sm:$0xf]
    %v1268 = vld [vmem:[%s4 + $0x11c] sm:$0xf]
    %v1269 = vld [vmem:[%s4 + $0x120] sm:$0xf]
    %v1270 = vld [vmem:[%s4 + $0x124] sm:$0xf]
    %v1271 = vld [vmem:[%s4 + $0x128] sm:$0xf]
    %v1272 = vld [vmem:[%s4 + $0x12c] sm:$0xf]
    %v1273 = vld [vmem:[%s4 + $0x130] sm:$0xf]
    %v1274 = vld [vmem:[%s4 + $0x134] sm:$0xf]
    %v1275 = vld [vmem:[%s4 + $0x138] sm:$0xf]
    %v1276 = vld [vmem:[%s4 + $0x13c] sm:$0xf]
    %v1277 = vld [vmem:[%s4 + $0x140] sm:$0xf]
    %v1278 = vld [vmem:[%s4 + $0x144] sm:$0xf]
    %v1279 = vld [vmem:[%s4 + $0x148] sm:$0xf]
    %v1280 = vld [vmem:[%s4 + $0x14c] sm:$0xf]
    %v1281 = vld [vmem:[%s4 + $0x150] sm:$0xf]
    %v1282 = vld [vmem:[%s4 + $0x154] sm:$0xf]
    %v1283 = vld [vmem:[%s4 + $0x158] sm:$0xf]
    %v1284 = vld [vmem:[%s4 + $0x15c] sm:$0xf]
    %v1285 = vld [vmem:[%s4 + $0x160] sm:$0xf]
    %v1286 = vld [vmem:[%s4 + $0x164] sm:$0xf]
    %v1287 = vld [vmem:[%s4 + $0x168] sm:$0xf]
    %v1288 = vld [vmem:[%s4 + $0x16c] sm:$0xf]
    %v1289 = vld [vmem:[%s4 + $0x170] sm:$0xf]
    %v1290 = vld [vmem:[%s4 + $0x174] sm:$0xf]
    %v1291 = vld [vmem:[%s4 + $0x178] sm:$0xf]
    %v1292 = vld [vmem:[%s4 + $0x17c] sm:$0xf]
    %v1293 = vld [vmem:[%s4 + $0x180] sm:$0xf]
    %v1294 = vld [vmem:[%s4 + $0x184] sm:$0xf]
    %v1295 = vld [vmem:[%s4 + $0x188] sm:$0xf]
    %v1296 = vld [vmem:[%s4 + $0x18c] sm:$0xf]
    %v1297 = vld [vmem:[%s4 + $0x190] sm:$0xf]
    %v1298 = vld [vmem:[%s4 + $0x194] sm:$0xf]
    %v1299 = vld [vmem:[%s4 + $0x198] sm:$0xf]
    %v1300 = vld [vmem:[%s4 + $0x19c] sm:$0xf]
    %v1301 = vld [vmem:[%s4 + $0x1a0] sm:$0xf]
    %v1302 = vld [vmem:[%s4 + $0x1a4] sm:$0xf]
    %v1303 = vld [vmem:[%s4 + $0x1a8] sm:$0xf]
    %v1304 = vld [vmem:[%s4 + $0x1ac] sm:$0xf]
    %v1305 = vld [vmem:[%s4 + $0x1b0] sm:$0xf]
    %v1306 = vld [vmem:[%s4 + $0x1b4] sm:$0xf]
    %v1307 = vld [vmem:[%s4 + $0x1b8] sm:$0xf]
    %v1308 = vld [vmem:[%s4 + $0x1bc] sm:$0xf]
    %v1309 = vld [vmem:[%s4 + $0x1c0] sm:$0xf]
    %v1310 = vld [vmem:[%s4 + $0x1c4] sm:$0xf]
    %v1311 = vld [vmem:[%s4 + $0x1c8] sm:$0xf]
    %v1312 = vld [vmem:[%s4 + $0x1cc] sm:$0xf]
    %v1313 = vld [vmem:[%s4 + $0x1d0] sm:$0xf]
    %v1314 = vld [vmem:[%s4 + $0x1d4] sm:$0xf]
    %v1315 = vld [vmem:[%s4 + $0x1d8] sm:$0xf]
    %v1316 = vld [vmem:[%s4 + $0x1dc] sm:$0xf]
    %v1317 = vld [vmem:[%s4 + $0x1e0] sm:$0xf]
    %v1318 = vld [vmem:[%s4 + $0x1e4] sm:$0xf]
    %v1319 = vld [vmem:[%s4 + $0x1e8] sm:$0xf]
    %v1320 = vld [vmem:[%s4 + $0x1ec] sm:$0xf]
    %v1321 = vld [vmem:[%s4 + $0x1f0] sm:$0xf]
    %v1322 = vld [vmem:[%s4 + $0x1f4] sm:$0xf]
    %v1323 = vld [vmem:[%s4 + $0x1f8] sm:$0xf]
    %v1324 = vld [vmem:[%s4 + $0x1fc] sm:$0xf]
    %v1325 = vld [vmem:[%s4 + $0x200] sm:$0xf]
    %v1326 = vld [vmem:[%s4 + $0x204] sm:$0xf]
    %v1327 = vld [vmem:[%s4 + $0x208] sm:$0xf]
    %v1328 = vld [vmem:[%s4 + $0x20c] sm:$0xf]
    %v1329 = vld [vmem:[%s4 + $0x210] sm:$0xf]
    %v1330 = vld [vmem:[%s4 + $0x214] sm:$0xf]
    %v1331 = vld [vmem:[%s4 + $0x218] sm:$0xf]
    %v1332 = vld [vmem:[%s4 + $0x21c] sm:$0xf]
    %v1333 = vld [vmem:[%s4 + $0x220] sm:$0xf]
    %v1334 = vld [vmem:[%s4 + $0x224] sm:$0xf]
    %v1335 = vld [vmem:[%s4 + $0x228] sm:$0xf]
    %v1336 = vld [vmem:[%s4 + $0x22c] sm:$0xf]
    %v1337 = vld [vmem:[%s4 + $0x230] sm:$0xf]
    %v1338 = vld [vmem:[%s4 + $0x234] sm:$0xf]
    %v1339 = vld [vmem:[%s4 + $0x238] sm:$0xf]
    %v1340 = vld [vmem:[%s4 + $0x23c] sm:$0xf]
    %v1341 = vld [vmem:[%s4 + $0x240] sm:$0xf]
    %v1342 = vld [vmem:[%s4 + $0x244] sm:$0xf]
    %v1343 = vld [vmem:[%s4 + $0x248] sm:$0xf]
    %v1344 = vld [vmem:[%s4 + $0x24c] sm:$0xf]
    %v1345 = vld [vmem:[%s4 + $0x250] sm:$0xf]
    %v1346 = vld [vmem:[%s4 + $0x254] sm:$0xf]
    %v1347 = vld [vmem:[%s4 + $0x258] sm:$0xf]
    %v1348 = vld [vmem:[%s4 + $0x25c] sm:$0xf]
    %v1349 = vld [vmem:[%s4 + $0x260] sm:$0xf]
    %v1350 = vld [vmem:[%s4 + $0x264] sm:$0xf]
    %v1351 = vld [vmem:[%s4 + $0x268] sm:$0xf]
    %v1352 = vld [vmem:[%s4 + $0x26c] sm:$0xf]
    %v1353 = vld [vmem:[%s4 + $0x270] sm:$0xf]
    %v1354 = vld [vmem:[%s4 + $0x274] sm:$0xf]
    %v1355 = vld [vmem:[%s4 + $0x278] sm:$0xf]
    %v1356 = vld [vmem:[%s4 + $0x27c] sm:$0xf]
    %v1357 = vld [vmem:[%s4 + $0x280] sm:$0xf]
    %v1358 = vld [vmem:[%s4 + $0x284] sm:$0xf]
    %v1359 = vld [vmem:[%s4 + $0x288] sm:$0xf]
    %v1360 = vld [vmem:[%s4 + $0x28c] sm:$0xf]
    %v1361 = vld [vmem:[%s4 + $0x290] sm:$0xf]
    %v1362 = vld [vmem:[%s4 + $0x294] sm:$0xf]
    %v1363 = vld [vmem:[%s4 + $0x298] sm:$0xf]
    %v1364 = vld [vmem:[%s4 + $0x29c] sm:$0xf]
    %v1365 = vld [vmem:[%s4 + $0x2a0] sm:$0xf]
    %v1366 = vld [vmem:[%s4 + $0x2a4] sm:$0xf]
    %v1367 = vld [vmem:[%s4 + $0x2a8] sm:$0xf]
    %v1368 = vld [vmem:[%s4 + $0x2ac] sm:$0xf]
    %v1369 = vld [vmem:[%s4 + $0x2b0] sm:$0xf]
    %v1370 = vld [vmem:[%s4 + $0x2b4] sm:$0xf]
    %v1371 = vld [vmem:[%s4 + $0x2b8] sm:$0xf]
    %v1372 = vld [vmem:[%s4 + $0x2bc] sm:$0xf]
    %v1373 = vld [vmem:[%s4 + $0x2c0] sm:$0xf]
    %v1374 = vld [vmem:[%s4 + $0x2c4] sm:$0xf]
    %v1375 = vld [vmem:[%s4 + $0x2c8] sm:$0xf]
    %v1376 = vld [vmem:[%s4 + $0x2cc] sm:$0xf]
    %v1377 = vld [vmem:[%s4 + $0x2d0] sm:$0xf]
    %v1378 = vld [vmem:[%s4 + $0x2d4] sm:$0xf]
    %v1379 = vld [vmem:[%s4 + $0x2d8] sm:$0xf]
    %v1380 = vld [vmem:[%s4 + $0x2dc] sm:$0xf]
    %v1381 = vld [vmem:[%s4 + $0x2e0] sm:$0xf]
    %v1382 = vld [vmem:[%s4 + $0x2e4] sm:$0xf]
    %v1383 = vld [vmem:[%s4 + $0x2e8] sm:$0xf]
    %v1384 = vld [vmem:[%s4 + $0x2ec] sm:$0xf]
    %v1385 = vld [vmem:[%s4 + $0x2f0] sm:$0xf]
    %v1386 = vld [vmem:[%s4 + $0x2f4] sm:$0xf]
    %v1387 = vld [vmem:[%s4 + $0x2f8] sm:$0xf]
    %v1388 = vld [vmem:[%s4 + $0x2fc] sm:$0xf]
    %v1389 = vld [vmem:[%s4 + $0x300] sm:$0xf]
    %v1390 = vld [vmem:[%s4 + $0x304] sm:$0xf]
    %v1391 = vld [vmem:[%s4 + $0x308] sm:$0xf]
    %v1392 = vld [vmem:[%s4 + $0x30c] sm:$0xf]
    %v1393 = vld [vmem:[%s4 + $0x310] sm:$0xf]
    %v1394 = vld [vmem:[%s4 + $0x314] sm:$0xf]
    %v1395 = vld [vmem:[%s4 + $0x318] sm:$0xf]
    %v1396 = vld [vmem:[%s4 + $0x31c] sm:$0xf]
    %v1397 = vld [vmem:[%s4 + $0x320] sm:$0xf]
    %v1398 = vld [vmem:[%s4 + $0x324] sm:$0xf]
    %v1399 = vld [vmem:[%s4 + $0x328] sm:$0xf]
    %v1400 = vld [vmem:[%s4 + $0x32c] sm:$0xf]
    %v1401 = vld [vmem:[%s4 + $0x330] sm:$0xf]
    %v1402 = vld [vmem:[%s4 + $0x334] sm:$0xf]
    %v1403 = vld [vmem:[%s4 + $0x338] sm:$0xf]
    %v1404 = vld [vmem:[%s4 + $0x33c] sm:$0xf]
    %v1405 = vld [vmem:[%s4 + $0x340] sm:$0xf]
    %v1406 = vld [vmem:[%s4 + $0x344] sm:$0xf]
    %v1407 = vld [vmem:[%s4 + $0x348] sm:$0xf]
    %v1408 = vld [vmem:[%s4 + $0x34c] sm:$0xf]
    %v1409 = vld [vmem:[%s4 + $0x350] sm:$0xf]
    %v1410 = vld [vmem:[%s4 + $0x354] sm:$0xf]
    %v1411 = vld [vmem:[%s4 + $0x358] sm:$0xf]
    %v1412 = vld [vmem:[%s4 + $0x35c] sm:$0xf]
    %v1413 = vld [vmem:[%s4 + $0x360] sm:$0xf]
    %v1414 = vld [vmem:[%s4 + $0x364] sm:$0xf]
    %v1415 = vld [vmem:[%s4 + $0x368] sm:$0xf]
    %v1416 = vld [vmem:[%s4 + $0x36c] sm:$0xf]
    %v1417 = vld [vmem:[%s4 + $0x370] sm:$0xf]
    %v1418 = vld [vmem:[%s4 + $0x374] sm:$0xf]
    %v1419 = vld [vmem:[%s4 + $0x378] sm:$0xf]
    %v1420 = vld [vmem:[%s4 + $0x37c] sm:$0xf]
    %v1421 = vld [vmem:[%s4 + $0x380] sm:$0xf]
    %v1422 = vld [vmem:[%s4 + $0x384] sm:$0xf]
    %v1423 = vld [vmem:[%s4 + $0x388] sm:$0xf]
    %v1424 = vld [vmem:[%s4 + $0x38c] sm:$0xf]
    %v1425 = vld [vmem:[%s4 + $0x390] sm:$0xf]
    %v1426 = vld [vmem:[%s4 + $0x394] sm:$0xf]
    %v1427 = vld [vmem:[%s4 + $0x398] sm:$0xf]
    %v1428 = vld [vmem:[%s4 + $0x39c] sm:$0xf]
    %v1429 = vld [vmem:[%s4 + $0x3a0] sm:$0xf]
    %v1430 = vld [vmem:[%s4 + $0x3a4] sm:$0xf]
    %v1431 = vld [vmem:[%s4 + $0x3a8] sm:$0xf]
    %v1432 = vld [vmem:[%s4 + $0x3ac] sm:$0xf]
    %v1433 = vld [vmem:[%s4 + $0x3b0] sm:$0xf]
    %v1434 = vld [vmem:[%s4 + $0x3b4] sm:$0xf]
    %v1435 = vld [vmem:[%s4 + $0x3b8] sm:$0xf]
    %v1436 = vld [vmem:[%s4 + $0x3bc] sm:$0xf]
    %v1437 = vld [vmem:[%s4 + $0x3c0] sm:$0xf]
    %v1438 = vld [vmem:[%s4 + $0x3c4] sm:$0xf]
    %v1439 = vld [vmem:[%s4 + $0x3c8] sm:$0xf]
    %v1440 = vld [vmem:[%s4 + $0x3cc] sm:$0xf]
    %v1441 = vld [vmem:[%s4 + $0x3d0] sm:$0xf]
    %v1442 = vld [vmem:[%s4 + $0x3d4] sm:$0xf]
    %v1443 = vld [vmem:[%s4 + $0x3d8] sm:$0xf]
    %v1444 = vld [vmem:[%s4 + $0x3dc] sm:$0xf]
    %v1445 = vld [vmem:[%s4 + $0x3e0] sm:$0xf]
    %v1446 = vld [vmem:[%s4 + $0x3e4] sm:$0xf]
    %v1447 = vld [vmem:[%s4 + $0x3e8] sm:$0xf]
    %v1448 = vld [vmem:[%s4 + $0x3ec] sm:$0xf]
    %v1449 = vld [vmem:[%s4 + $0x3f0] sm:$0xf]
    %v1450 = vld [vmem:[%s4 + $0x3f4] sm:$0xf]
    %v1451 = vld [vmem:[%s4 + $0x3f8] sm:$0xf]
    %v1452 = vld [vmem:[%s4 + $0x3fc] sm:$0xf]
    %v1453 = vld [vmem:[%s4 + $0x400] sm:$0xf]
    %v1454 = vld [vmem:[%s4 + $0x404] sm:$0xf]
    %v1455 = vld [vmem:[%s4 + $0x408] sm:$0xf]
    %v1456 = vld [vmem:[%s4 + $0x40c] sm:$0xf]
    %v1457 = vld [vmem:[%s4 + $0x410] sm:$0xf]
    %v1458 = vld [vmem:[%s4 + $0x414] sm:$0xf]
    %v1459 = vld [vmem:[%s4 + $0x418] sm:$0xf]
    %v1460 = vld [vmem:[%s4 + $0x41c] sm:$0xf]
    %v1461 = vld [vmem:[%s4 + $0x420] sm:$0xf]
    %v1462 = vld [vmem:[%s4 + $0x424] sm:$0xf]
    %v1463 = vld [vmem:[%s4 + $0x428] sm:$0xf]
    %v1464 = vld [vmem:[%s4 + $0x42c] sm:$0xf]
    %v1465 = vld [vmem:[%s4 + $0x430] sm:$0xf]
    %v1466 = vld [vmem:[%s4 + $0x434] sm:$0xf]
    %v1467 = vld [vmem:[%s4 + $0x438] sm:$0xf]
    %v1468 = vld [vmem:[%s4 + $0x43c] sm:$0xf]
    %v1469 = vld [vmem:[%s4 + $0x440] sm:$0xf]
    %v1470 = vld [vmem:[%s4 + $0x444] sm:$0xf]
    %v1471 = vld [vmem:[%s4 + $0x448] sm:$0xf]
    %v1472 = vld [vmem:[%s4 + $0x44c] sm:$0xf]
    %v1473 = vld [vmem:[%s4 + $0x450] sm:$0xf]
    %v1474 = vld [vmem:[%s4 + $0x454] sm:$0xf]
    %v1475 = vld [vmem:[%s4 + $0x458] sm:$0xf]
    %v1476 = vld [vmem:[%s4 + $0x45c] sm:$0xf]
    %v1477 = vld [vmem:[%s4 + $0x460] sm:$0xf]
    %v1478 = vld [vmem:[%s4 + $0x464] sm:$0xf]
    %v1479 = vld [vmem:[%s4 + $0x468] sm:$0xf]
    %v1480 = vld [vmem:[%s4 + $0x46c] sm:$0xf]
    %v1481 = vld [vmem:[%s4 + $0x470] sm:$0xf]
    %v1482 = vld [vmem:[%s4 + $0x474] sm:$0xf]
    %v1483 = vld [vmem:[%s4 + $0x478] sm:$0xf]
    %v1484 = vld [vmem:[%s4 + $0x47c] sm:$0xf]
    %v1485 = vld [vmem:[%s4 + $0x480] sm:$0xf]
    %v1486 = vld [vmem:[%s4 + $0x484] sm:$0xf]
    %v1487 = vld [vmem:[%s4 + $0x488] sm:$0xf]
    %v1488 = vld [vmem:[%s4 + $0x48c] sm:$0xf]
    %v1489 = vld [vmem:[%s4 + $0x490] sm:$0xf]
    %v1490 = vld [vmem:[%s4 + $0x494] sm:$0xf]
    %v1491 = vld [vmem:[%s4 + $0x498] sm:$0xf]
    %v1492 = vld [vmem:[%s4 + $0x49c] sm:$0xf]
    %v1493 = vld [vmem:[%s4 + $0x4a0] sm:$0xf]
    %v1494 = vld [vmem:[%s4 + $0x4a4] sm:$0xf]
    %v1495 = vld [vmem:[%s4 + $0x4a8] sm:$0xf]
    %v1496 = vld [vmem:[%s4 + $0x4ac] sm:$0xf]
    %v1497 = vld [vmem:[%s4 + $0x4b0] sm:$0xf]
    %v1498 = vld [vmem:[%s4 + $0x4b4] sm:$0xf]
    %v1499 = vld [vmem:[%s4 + $0x4b8] sm:$0xf]
    %v1500 = vld [vmem:[%s4 + $0x4bc] sm:$0xf]
    %v1501 = vld [vmem:[%s4 + $0x4c0] sm:$0xf]
    %v1502 = vld [vmem:[%s4 + $0x4c4] sm:$0xf]
    %v1503 = vld [vmem:[%s4 + $0x4c8] sm:$0xf]
    %v1504 = vld [vmem:[%s4 + $0x4cc] sm:$0xf]
    %v1505 = vld [vmem:[%s4 + $0x4d0] sm:$0xf]
    %v1506 = vld [vmem:[%s4 + $0x4d4] sm:$0xf]
    %v1507 = vld [vmem:[%s4 + $0x4d8] sm:$0xf]
    %v1508 = vld [vmem:[%s4 + $0x4dc] sm:$0xf]
    %v1509 = vld [vmem:[%s4 + $0x4e0] sm:$0xf]
    %v1510 = vld [vmem:[%s4 + $0x4e4] sm:$0xf]
    %v1511 = vld [vmem:[%s4 + $0x4e8] sm:$0xf]
    %v1512 = vld [vmem:[%s4 + $0x4ec] sm:$0xf]
    %v1513 = vld [vmem:[%s4 + $0x4f0] sm:$0xf]
    %v1514 = vld [vmem:[%s4 + $0x4f4] sm:$0xf]
    %v1515 = vld [vmem:[%s4 + $0x4f8] sm:$0xf]
    %v1516 = vld [vmem:[%s4 + $0x4fc] sm:$0xf]
    %v1517 = vld [vmem:[%s4 + $0x500] sm:$0xf]
    %v1518 = vld [vmem:[%s4 + $0x504] sm:$0xf]
    %v1519 = vld [vmem:[%s4 + $0x508] sm:$0xf]
    %v1520 = vld [vmem:[%s4 + $0x50c] sm:$0xf]
    %v1521 = vld [vmem:[%s4 + $0x510] sm:$0xf]
    %v1522 = vld [vmem:[%s4 + $0x514] sm:$0xf]
    %v1523 = vld [vmem:[%s4 + $0x518] sm:$0xf]
    %v1524 = vld [vmem:[%s4 + $0x51c] sm:$0xf]
    %v1525 = vld [vmem:[%s4 + $0x520] sm:$0xf]
    %v1526 = vld [vmem:[%s4 + $0x524] sm:$0xf]
    %v1527 = vld [vmem:[%s4 + $0x528] sm:$0xf]
    %v1528 = vld [vmem:[%s4 + $0x52c] sm:$0xf]
    %v1529 = vld [vmem:[%s4 + $0x530] sm:$0xf]
    %v1530 = vld [vmem:[%s4 + $0x534] sm:$0xf]
    %v1531 = vld [vmem:[%s4 + $0x538] sm:$0xf]
    %v1532 = vld [vmem:[%s4 + $0x53c] sm:$0xf]
    %v1533 = vld [vmem:[%s4 + $0x540] sm:$0xf]
    %v1534 = vld [vmem:[%s4 + $0x544] sm:$0xf]
    %v1535 = vld [vmem:[%s4 + $0x548] sm:$0xf]
    %v1536 = vld [vmem:[%s4 + $0x54c] sm:$0xf]
    %v1537 = vld [vmem:[%s4 + $0x550] sm:$0xf]
    %v1538 = vld [vmem:[%s4 + $0x554] sm:$0xf]
    %v1539 = vld [vmem:[%s4 + $0x558] sm:$0xf]
    %v1540 = vld [vmem:[%s4 + $0x55c] sm:$0xf]
    %v1541 = vld [vmem:[%s4 + $0x560] sm:$0xf]
    %v1542 = vld [vmem:[%s4 + $0x564] sm:$0xf]
    %v1543 = vld [vmem:[%s4 + $0x568] sm:$0xf]
    %v1544 = vld [vmem:[%s4 + $0x56c] sm:$0xf]
    %v1545 = vld [vmem:[%s4 + $0x570] sm:$0xf]
    %v1546 = vld [vmem:[%s4 + $0x574] sm:$0xf]
    %v1547 = vld [vmem:[%s4 + $0x578] sm:$0xf]
    %v1548 = vld [vmem:[%s4 + $0x57c] sm:$0xf]
    %v1549 = vld [vmem:[%s4 + $0x580] sm:$0xf]
    %v1550 = vld [vmem:[%s4 + $0x584] sm:$0xf]
    %v1551 = vld [vmem:[%s4 + $0x588] sm:$0xf]
    %v1552 = vld [vmem:[%s4 + $0x58c] sm:$0xf]
    %v1553 = vld [vmem:[%s4 + $0x590] sm:$0xf]
    %v1554 = vld [vmem:[%s4 + $0x594] sm:$0xf]
    %v1555 = vld [vmem:[%s4 + $0x598] sm:$0xf]
    %v1556 = vld [vmem:[%s4 + $0x59c] sm:$0xf]
    %v1557 = vld [vmem:[%s4 + $0x5a0] sm:$0xf]
    %v1558 = vld [vmem:[%s4 + $0x5a4] sm:$0xf]
    %v1559 = vld [vmem:[%s4 + $0x5a8] sm:$0xf]
    %v1560 = vld [vmem:[%s4 + $0x5ac] sm:$0xf]
    %v1561 = vld [vmem:[%s4 + $0x5b0] sm:$0xf]
    %v1562 = vld [vmem:[%s4 + $0x5b4] sm:$0xf]
    %v1563 = vld [vmem:[%s4 + $0x5b8] sm:$0xf]
    %v1564 = vld [vmem:[%s4 + $0x5bc] sm:$0xf]
    %v1565 = vld [vmem:[%s4 + $0x5c0] sm:$0xf]
    %v1566 = vld [vmem:[%s4 + $0x5c4] sm:$0xf]
    %v1567 = vld [vmem:[%s4 + $0x5c8] sm:$0xf]
    %v1568 = vld [vmem:[%s4 + $0x5cc] sm:$0xf]
    %v1569 = vld [vmem:[%s4 + $0x5d0] sm:$0xf]
    %v1570 = vld [vmem:[%s4 + $0x5d4] sm:$0xf]
    %v1571 = vld [vmem:[%s4 + $0x5d8] sm:$0xf]
    %v1572 = vld [vmem:[%s4 + $0x5dc] sm:$0xf]
    %v1573 = vld [vmem:[%s4 + $0x5e0] sm:$0xf]
    %v1574 = vld [vmem:[%s4 + $0x5e4] sm:$0xf]
    %v1575 = vld [vmem:[%s4 + $0x5e8] sm:$0xf]
    %v1576 = vld [vmem:[%s4 + $0x5ec] sm:$0xf]
    %v1577 = vld [vmem:[%s4 + $0x5f0] sm:$0xf]
    %v1578 = vld [vmem:[%s4 + $0x5f4] sm:$0xf]
    %v1579 = vld [vmem:[%s4 + $0x5f8] sm:$0xf]
    %v1580 = vld [vmem:[%s4 + $0x5fc] sm:$0xf]
    %v1581 = vld [vmem:[%s4 + $0x600] sm:$0xf]
    %v1582 = vld [vmem:[%s4 + $0x604] sm:$0xf]
    %v1583 = vld [vmem:[%s4 + $0x608] sm:$0xf]
    %v1584 = vld [vmem:[%s4 + $0x60c] sm:$0xf]
    %v1585 = vld [vmem:[%s4 + $0x610] sm:$0xf]
    %v1586 = vld [vmem:[%s4 + $0x614] sm:$0xf]
    %v1587 = vld [vmem:[%s4 + $0x618] sm:$0xf]
    %v1588 = vld [vmem:[%s4 + $0x61c] sm:$0xf]
    %v1589 = vld [vmem:[%s4 + $0x620] sm:$0xf]
    %v1590 = vld [vmem:[%s4 + $0x624] sm:$0xf]
    %v1591 = vld [vmem:[%s4 + $0x628] sm:$0xf]
    %v1592 = vld [vmem:[%s4 + $0x62c] sm:$0xf]
    %v1593 = vld [vmem:[%s4 + $0x630] sm:$0xf]
    %v1594 = vld [vmem:[%s4 + $0x634] sm:$0xf]
    %v1595 = vld [vmem:[%s4 + $0x638] sm:$0xf]
    %v1596 = vld [vmem:[%s4 + $0x63c] sm:$0xf]
    %v1597 = vld [vmem:[%s4 + $0x640] sm:$0xf]
    %v1598 = vld [vmem:[%s4 + $0x644] sm:$0xf]
    %v1599 = vld [vmem:[%s4 + $0x648] sm:$0xf]
    %v1600 = vld [vmem:[%s4 + $0x64c] sm:$0xf]
    %v1601 = vld [vmem:[%s4 + $0x650] sm:$0xf]
    %v1602 = vld [vmem:[%s4 + $0x654] sm:$0xf]
    %v1603 = vld [vmem:[%s4 + $0x658] sm:$0xf]
    %v1604 = vld [vmem:[%s4 + $0x65c] sm:$0xf]
    %v1605 = vld [vmem:[%s4 + $0x660] sm:$0xf]
    %v1606 = vld [vmem:[%s4 + $0x664] sm:$0xf]
    %v1607 = vld [vmem:[%s4 + $0x668] sm:$0xf]
    %v1608 = vld [vmem:[%s4 + $0x66c] sm:$0xf]
    %v1609 = vld [vmem:[%s4 + $0x670] sm:$0xf]
    %v1610 = vld [vmem:[%s4 + $0x674] sm:$0xf]
    %v1611 = vld [vmem:[%s4 + $0x678] sm:$0xf]
    %v1612 = vld [vmem:[%s4 + $0x67c] sm:$0xf]
    %v1613 = vld [vmem:[%s4 + $0x680] sm:$0xf]
    %v1614 = vld [vmem:[%s4 + $0x684] sm:$0xf]
    %v1615 = vld [vmem:[%s4 + $0x688] sm:$0xf]
    %v1616 = vld [vmem:[%s4 + $0x68c] sm:$0xf]
    %v1617 = vld [vmem:[%s4 + $0x690] sm:$0xf]
    %v1618 = vld [vmem:[%s4 + $0x694] sm:$0xf]
    %v1619 = vld [vmem:[%s4 + $0x698] sm:$0xf]
    %v1620 = vld [vmem:[%s4 + $0x69c] sm:$0xf]
    %v1621 = vld [vmem:[%s4 + $0x6a0] sm:$0xf]
    %v1622 = vld [vmem:[%s4 + $0x6a4] sm:$0xf]
    %v1623 = vld [vmem:[%s4 + $0x6a8] sm:$0xf]
    %v1624 = vld [vmem:[%s4 + $0x6ac] sm:$0xf]
    %v1625 = vld [vmem:[%s4 + $0x6b0] sm:$0xf]
    %v1626 = vld [vmem:[%s4 + $0x6b4] sm:$0xf]
    %v1627 = vld [vmem:[%s4 + $0x6b8] sm:$0xf]
    %v1628 = vld [vmem:[%s4 + $0x6bc] sm:$0xf]
    %v1629 = vld [vmem:[%s4 + $0x6c0] sm:$0xf]
    %v1630 = vld [vmem:[%s4 + $0x6c4] sm:$0xf]
    %v1631 = vld [vmem:[%s4 + $0x6c8] sm:$0xf]
    %v1632 = vld [vmem:[%s4 + $0x6cc] sm:$0xf]
    %v1633 = vld [vmem:[%s4 + $0x6d0] sm:$0xf]
    %v1634 = vld [vmem:[%s4 + $0x6d4] sm:$0xf]
    %v1635 = vld [vmem:[%s4 + $0x6d8] sm:$0xf]
    %v1636 = vld [vmem:[%s4 + $0x6dc] sm:$0xf]
    %v1637 = vld [vmem:[%s4 + $0x6e0] sm:$0xf]
    %v1638 = vld [vmem:[%s4 + $0x6e4] sm:$0xf]
    %v1639 = vld [vmem:[%s4 + $0x6e8] sm:$0xf]
    %v1640 = vld [vmem:[%s4 + $0x6ec] sm:$0xf]
    %v1641 = vld [vmem:[%s4 + $0x6f0] sm:$0xf]
    %v1642 = vld [vmem:[%s4 + $0x6f4] sm:$0xf]
    %v1643 = vld [vmem:[%s4 + $0x6f8] sm:$0xf]
    %v1644 = vld [vmem:[%s4 + $0x6fc] sm:$0xf]
    %v1645 = vld [vmem:[%s4 + $0x700] sm:$0xf]
    %v1646 = vld [vmem:[%s4 + $0x704] sm:$0xf]
    %v1647 = vld [vmem:[%s4 + $0x708] sm:$0xf]
    %v1648 = vld [vmem:[%s4 + $0x70c] sm:$0xf]
    %v1649 = vld [vmem:[%s4 + $0x710] sm:$0xf]
    %v1650 = vld [vmem:[%s4 + $0x714] sm:$0xf]
    %v1651 = vld [vmem:[%s4 + $0x718] sm:$0xf]
    %v1652 = vld [vmem:[%s4 + $0x71c] sm:$0xf]
    %v1653 = vld [vmem:[%s4 + $0x720] sm:$0xf]
    %v1654 = vld [vmem:[%s4 + $0x724] sm:$0xf]
    %v1655 = vld [vmem:[%s4 + $0x728] sm:$0xf]
    %v1656 = vld [vmem:[%s4 + $0x72c] sm:$0xf]
    %v1657 = vld [vmem:[%s4 + $0x730] sm:$0xf]
    %v1658 = vld [vmem:[%s4 + $0x734] sm:$0xf]
    %v1659 = vld [vmem:[%s4 + $0x738] sm:$0xf]
    %v1660 = vld [vmem:[%s4 + $0x73c] sm:$0xf]
    %v1661 = vld [vmem:[%s4 + $0x740] sm:$0xf]
    %v1662 = vld [vmem:[%s4 + $0x744] sm:$0xf]
    %v1663 = vld [vmem:[%s4 + $0x748] sm:$0xf]
    %v1664 = vld [vmem:[%s4 + $0x74c] sm:$0xf]
    %v1665 = vld [vmem:[%s4 + $0x750] sm:$0xf]
    %v1666 = vld [vmem:[%s4 + $0x754] sm:$0xf]
    %v1667 = vld [vmem:[%s4 + $0x758] sm:$0xf]
    %v1668 = vld [vmem:[%s4 + $0x75c] sm:$0xf]
    %v1669 = vld [vmem:[%s4 + $0x760] sm:$0xf]
    %v1670 = vld [vmem:[%s4 + $0x764] sm:$0xf]
    %v1671 = vld [vmem:[%s4 + $0x768] sm:$0xf]
    %v1672 = vld [vmem:[%s4 + $0x76c] sm:$0xf]
    %v1673 = vld [vmem:[%s4 + $0x770] sm:$0xf]
    %v1674 = vld [vmem:[%s4 + $0x774] sm:$0xf]
    %v1675 = vld [vmem:[%s4 + $0x778] sm:$0xf]
    %v1676 = vld [vmem:[%s4 + $0x77c] sm:$0xf]
    %v1677 = vld [vmem:[%s4 + $0x780] sm:$0xf]
    %v1678 = vld [vmem:[%s4 + $0x784] sm:$0xf]
    %v1679 = vld [vmem:[%s4 + $0x788] sm:$0xf]
    %v1680 = vld [vmem:[%s4 + $0x78c] sm:$0xf]
    %v1681 = vld [vmem:[%s4 + $0x790] sm:$0xf]
    %v1682 = vld [vmem:[%s4 + $0x794] sm:$0xf]
    %v1683 = vld [vmem:[%s4 + $0x798] sm:$0xf]
    %v1684 = vld [vmem:[%s4 + $0x79c] sm:$0xf]
    %v1685 = vld [vmem:[%s4 + $0x7a0] sm:$0xf]
    %v1686 = vld [vmem:[%s4 + $0x7a4] sm:$0xf]
    %v1687 = vld [vmem:[%s4 + $0x7a8] sm:$0xf]
    %v1688 = vld [vmem:[%s4 + $0x7ac] sm:$0xf]
    %v1689 = vld [vmem:[%s4 + $0x7b0] sm:$0xf]
    %v1690 = vld [vmem:[%s4 + $0x7b4] sm:$0xf]
    %v1691 = vld [vmem:[%s4 + $0x7b8] sm:$0xf]
    %v1692 = vld [vmem:[%s4 + $0x7bc] sm:$0xf]
    %v1693 = vld [vmem:[%s4 + $0x7c0] sm:$0xf]
    %v1694 = vld [vmem:[%s4 + $0x7c4] sm:$0xf]
    %v1695 = vld [vmem:[%s4 + $0x7c8] sm:$0xf]
    %v1696 = vld [vmem:[%s4 + $0x7cc] sm:$0xf]
    %v1697 = vld [vmem:[%s4 + $0x7d0] sm:$0xf]
    %v1698 = vld [vmem:[%s4 + $0x7d4] sm:$0xf]
    %v1699 = vld [vmem:[%s4 + $0x7d8] sm:$0xf]
    %v1700 = vld [vmem:[%s4 + $0x7dc] sm:$0xf]
    %v1701 = vld [vmem:[%s4 + $0x7e0] sm:$0xf]
    %v1702 = vld [vmem:[%s4 + $0x7e4] sm:$0xf]
    %v1703 = vld [vmem:[%s4 + $0x7e8] sm:$0xf]
    %v1704 = vld [vmem:[%s4 + $0x7ec] sm:$0xf]
    %v1705 = vld [vmem:[%s4 + $0x7f0] sm:$0xf]
    %v1706 = vld [vmem:[%s4 + $0x7f4] sm:$0xf]
    %v1707 = vld [vmem:[%s4 + $0x7f8] sm:$0xf]
    %v1708 = vld [vmem:[%s4 + $0x7fc] sm:$0xf]
    %v1709 = vld [vmem:[%s5] sm:$0x1]
    %v1711 = vperm.slane %v1709, 0
    %v2225 = vunpack.c.l.b16 %v1197
    %v2226 = vunpack.c.l.b16 %v1198
    %v2227 = vunpack.c.l.b16 %v1199
    %v2228 = vunpack.c.l.b16 %v1200
    %v2229 = vunpack.c.l.b16 %v1201
    %v2230 = vunpack.c.l.b16 %v1202
    %v2231 = vunpack.c.l.b16 %v1203
    %v2232 = vunpack.c.l.b16 %v1204
    %v2233 = vunpack.c.l.b16 %v1205
    %v2234 = vunpack.c.l.b16 %v1206
    %v2235 = vunpack.c.l.b16 %v1207
    %v2236 = vunpack.c.l.b16 %v1208
    %v2237 = vunpack.c.l.b16 %v1209
    %v2238 = vunpack.c.l.b16 %v1210
    %v2239 = vunpack.c.l.b16 %v1211
    %v2240 = vunpack.c.l.b16 %v1212
    %v2241 = vunpack.c.l.b16 %v1213
    %v2242 = vunpack.c.l.b16 %v1214
    %v2243 = vunpack.c.l.b16 %v1215
    %v2244 = vunpack.c.l.b16 %v1216
    %v2245 = vunpack.c.l.b16 %v1217
    %v2246 = vunpack.c.l.b16 %v1218
    %v2247 = vunpack.c.l.b16 %v1219
    %v2248 = vunpack.c.l.b16 %v1220
    %v2249 = vunpack.c.l.b16 %v1221
    %v2250 = vunpack.c.l.b16 %v1222
    %v2251 = vunpack.c.l.b16 %v1223
    %v2252 = vunpack.c.l.b16 %v1224
    %v2253 = vunpack.c.l.b16 %v1225
    %v2254 = vunpack.c.l.b16 %v1226
    %v2255 = vunpack.c.l.b16 %v1227
    %v2256 = vunpack.c.l.b16 %v1228
    %v2257 = vunpack.c.l.b16 %v1229
    %v2258 = vunpack.c.l.b16 %v1230
    %v2259 = vunpack.c.l.b16 %v1231
    %v2260 = vunpack.c.l.b16 %v1232
    %v2261 = vunpack.c.l.b16 %v1233
    %v2262 = vunpack.c.l.b16 %v1234
    %v2263 = vunpack.c.l.b16 %v1235
    %v2264 = vunpack.c.l.b16 %v1236
    %v2265 = vunpack.c.l.b16 %v1237
    %v2266 = vunpack.c.l.b16 %v1238
    %v2267 = vunpack.c.l.b16 %v1239
    %v2268 = vunpack.c.l.b16 %v1240
    %v2269 = vunpack.c.l.b16 %v1241
    %v2270 = vunpack.c.l.b16 %v1242
    %v2271 = vunpack.c.l.b16 %v1243
    %v2272 = vunpack.c.l.b16 %v1244
    %v2273 = vunpack.c.l.b16 %v1245
    %v2274 = vunpack.c.l.b16 %v1246
    %v2275 = vunpack.c.l.b16 %v1247
    %v2276 = vunpack.c.l.b16 %v1248
    %v2277 = vunpack.c.l.b16 %v1249
    %v2278 = vunpack.c.l.b16 %v1250
    %v2279 = vunpack.c.l.b16 %v1251
    %v2280 = vunpack.c.l.b16 %v1252
    %v2281 = vunpack.c.l.b16 %v1253
    %v2282 = vunpack.c.l.b16 %v1254
    %v2283 = vunpack.c.l.b16 %v1255
    %v2284 = vunpack.c.l.b16 %v1256
    %v2285 = vunpack.c.l.b16 %v1257
    %v2286 = vunpack.c.l.b16 %v1258
    %v2287 = vunpack.c.l.b16 %v1259
    %v2288 = vunpack.c.l.b16 %v1260
    %v2289 = vunpack.c.l.b16 %v1261
    %v2290 = vunpack.c.l.b16 %v1262
    %v2291 = vunpack.c.l.b16 %v1263
    %v2292 = vunpack.c.l.b16 %v1264
    %v2293 = vunpack.c.l.b16 %v1265
    %v2294 = vunpack.c.l.b16 %v1266
    %v2295 = vunpack.c.l.b16 %v1267
    %v2296 = vunpack.c.l.b16 %v1268
    %v2297 = vunpack.c.l.b16 %v1269
    %v2298 = vunpack.c.l.b16 %v1270
    %v2299 = vunpack.c.l.b16 %v1271
    %v2300 = vunpack.c.l.b16 %v1272
    %v2301 = vunpack.c.l.b16 %v1273
    %v2302 = vunpack.c.l.b16 %v1274
    %v2303 = vunpack.c.l.b16 %v1275
    %v2304 = vunpack.c.l.b16 %v1276
    %v2305 = vunpack.c.l.b16 %v1277
    %v2306 = vunpack.c.l.b16 %v1278
    %v2307 = vunpack.c.l.b16 %v1279
    %v2308 = vunpack.c.l.b16 %v1280
    %v2309 = vunpack.c.l.b16 %v1281
    %v2310 = vunpack.c.l.b16 %v1282
    %v2311 = vunpack.c.l.b16 %v1283
    %v2312 = vunpack.c.l.b16 %v1284
    %v2313 = vunpack.c.l.b16 %v1285
    %v2314 = vunpack.c.l.b16 %v1286
    %v2315 = vunpack.c.l.b16 %v1287
    %v2316 = vunpack.c.l.b16 %v1288
    %v2317 = vunpack.c.l.b16 %v1289
    %v2318 = vunpack.c.l.b16 %v1290
    %v2319 = vunpack.c.l.b16 %v1291
    %v2320 = vunpack.c.l.b16 %v1292
    %v2321 = vunpack.c.l.b16 %v1293
    %v2322 = vunpack.c.l.b16 %v1294
    %v2323 = vunpack.c.l.b16 %v1295
    %v2324 = vunpack.c.l.b16 %v1296
    %v2325 = vunpack.c.l.b16 %v1297
    %v2326 = vunpack.c.l.b16 %v1298
    %v2327 = vunpack.c.l.b16 %v1299
    %v2328 = vunpack.c.l.b16 %v1300
    %v2329 = vunpack.c.l.b16 %v1301
    %v2330 = vunpack.c.l.b16 %v1302
    %v2331 = vunpack.c.l.b16 %v1303
    %v2332 = vunpack.c.l.b16 %v1304
    %v2333 = vunpack.c.l.b16 %v1305
    %v2334 = vunpack.c.l.b16 %v1306
    %v2335 = vunpack.c.l.b16 %v1307
    %v2336 = vunpack.c.l.b16 %v1308
    %v2337 = vunpack.c.l.b16 %v1309
    %v2338 = vunpack.c.l.b16 %v1310
    %v2339 = vunpack.c.l.b16 %v1311
    %v2340 = vunpack.c.l.b16 %v1312
    %v2341 = vunpack.c.l.b16 %v1313
    %v2342 = vunpack.c.l.b16 %v1314
    %v2343 = vunpack.c.l.b16 %v1315
    %v2344 = vunpack.c.l.b16 %v1316
    %v2345 = vunpack.c.l.b16 %v1317
    %v2346 = vunpack.c.l.b16 %v1318
    %v2347 = vunpack.c.l.b16 %v1319
    %v2348 = vunpack.c.l.b16 %v1320
    %v2349 = vunpack.c.l.b16 %v1321
    %v2350 = vunpack.c.l.b16 %v1322
    %v2351 = vunpack.c.l.b16 %v1323
    %v2352 = vunpack.c.l.b16 %v1324
    %v2353 = vunpack.c.l.b16 %v1325
    %v2354 = vunpack.c.l.b16 %v1326
    %v2355 = vunpack.c.l.b16 %v1327
    %v2356 = vunpack.c.l.b16 %v1328
    %v2357 = vunpack.c.l.b16 %v1329
    %v2358 = vunpack.c.l.b16 %v1330
    %v2359 = vunpack.c.l.b16 %v1331
    %v2360 = vunpack.c.l.b16 %v1332
    %v2361 = vunpack.c.l.b16 %v1333
    %v2362 = vunpack.c.l.b16 %v1334
    %v2363 = vunpack.c.l.b16 %v1335
    %v2364 = vunpack.c.l.b16 %v1336
    %v2365 = vunpack.c.l.b16 %v1337
    %v2366 = vunpack.c.l.b16 %v1338
    %v2367 = vunpack.c.l.b16 %v1339
    %v2368 = vunpack.c.l.b16 %v1340
    %v2369 = vunpack.c.l.b16 %v1341
    %v2370 = vunpack.c.l.b16 %v1342
    %v2371 = vunpack.c.l.b16 %v1343
    %v2372 = vunpack.c.l.b16 %v1344
    %v2373 = vunpack.c.l.b16 %v1345
    %v2374 = vunpack.c.l.b16 %v1346
    %v2375 = vunpack.c.l.b16 %v1347
    %v2376 = vunpack.c.l.b16 %v1348
    %v2377 = vunpack.c.l.b16 %v1349
    %v2378 = vunpack.c.l.b16 %v1350
    %v2379 = vunpack.c.l.b16 %v1351
    %v2380 = vunpack.c.l.b16 %v1352
    %v2381 = vunpack.c.l.b16 %v1353
    %v2382 = vunpack.c.l.b16 %v1354
    %v2383 = vunpack.c.l.b16 %v1355
    %v2384 = vunpack.c.l.b16 %v1356
    %v2385 = vunpack.c.l.b16 %v1357
    %v2386 = vunpack.c.l.b16 %v1358
    %v2387 = vunpack.c.l.b16 %v1359
    %v2388 = vunpack.c.l.b16 %v1360
    %v2389 = vunpack.c.l.b16 %v1361
    %v2390 = vunpack.c.l.b16 %v1362
    %v2391 = vunpack.c.l.b16 %v1363
    %v2392 = vunpack.c.l.b16 %v1364
    %v2393 = vunpack.c.l.b16 %v1365
    %v2394 = vunpack.c.l.b16 %v1366
    %v2395 = vunpack.c.l.b16 %v1367
    %v2396 = vunpack.c.l.b16 %v1368
    %v2397 = vunpack.c.l.b16 %v1369
    %v2398 = vunpack.c.l.b16 %v1370
    %v2399 = vunpack.c.l.b16 %v1371
    %v2400 = vunpack.c.l.b16 %v1372
    %v2401 = vunpack.c.l.b16 %v1373
    %v2402 = vunpack.c.l.b16 %v1374
    %v2403 = vunpack.c.l.b16 %v1375
    %v2404 = vunpack.c.l.b16 %v1376
    %v2405 = vunpack.c.l.b16 %v1377
    %v2406 = vunpack.c.l.b16 %v1378
    %v2407 = vunpack.c.l.b16 %v1379
    %v2408 = vunpack.c.l.b16 %v1380
    %v2409 = vunpack.c.l.b16 %v1381
    %v2410 = vunpack.c.l.b16 %v1382
    %v2411 = vunpack.c.l.b16 %v1383
    %v2412 = vunpack.c.l.b16 %v1384
    %v2413 = vunpack.c.l.b16 %v1385
    %v2414 = vunpack.c.l.b16 %v1386
    %v2415 = vunpack.c.l.b16 %v1387
    %v2416 = vunpack.c.l.b16 %v1388
    %v2417 = vunpack.c.l.b16 %v1389
    %v2418 = vunpack.c.l.b16 %v1390
    %v2419 = vunpack.c.l.b16 %v1391
    %v2420 = vunpack.c.l.b16 %v1392
    %v2421 = vunpack.c.l.b16 %v1393
    %v2422 = vunpack.c.l.b16 %v1394
    %v2423 = vunpack.c.l.b16 %v1395
    %v2424 = vunpack.c.l.b16 %v1396
    %v2425 = vunpack.c.l.b16 %v1397
    %v2426 = vunpack.c.l.b16 %v1398
    %v2427 = vunpack.c.l.b16 %v1399
    %v2428 = vunpack.c.l.b16 %v1400
    %v2429 = vunpack.c.l.b16 %v1401
    %v2430 = vunpack.c.l.b16 %v1402
    %v2431 = vunpack.c.l.b16 %v1403
    %v2432 = vunpack.c.l.b16 %v1404
    %v2433 = vunpack.c.l.b16 %v1405
    %v2434 = vunpack.c.l.b16 %v1406
    %v2435 = vunpack.c.l.b16 %v1407
    %v2436 = vunpack.c.l.b16 %v1408
    %v2437 = vunpack.c.l.b16 %v1409
    %v2438 = vunpack.c.l.b16 %v1410
    %v2439 = vunpack.c.l.b16 %v1411
    %v2440 = vunpack.c.l.b16 %v1412
    %v2441 = vunpack.c.l.b16 %v1413
    %v2442 = vunpack.c.l.b16 %v1414
    %v2443 = vunpack.c.l.b16 %v1415
    %v2444 = vunpack.c.l.b16 %v1416
    %v2445 = vunpack.c.l.b16 %v1417
    %v2446 = vunpack.c.l.b16 %v1418
    %v2447 = vunpack.c.l.b16 %v1419
    %v2448 = vunpack.c.l.b16 %v1420
    %v2449 = vunpack.c.l.b16 %v1421
    %v2450 = vunpack.c.l.b16 %v1422
    %v2451 = vunpack.c.l.b16 %v1423
    %v2452 = vunpack.c.l.b16 %v1424
    %v2453 = vunpack.c.l.b16 %v1425
    %v2454 = vunpack.c.l.b16 %v1426
    %v2455 = vunpack.c.l.b16 %v1427
    %v2456 = vunpack.c.l.b16 %v1428
    %v2457 = vunpack.c.l.b16 %v1429
    %v2458 = vunpack.c.l.b16 %v1430
    %v2459 = vunpack.c.l.b16 %v1431
    %v2460 = vunpack.c.l.b16 %v1432
    %v2461 = vunpack.c.l.b16 %v1433
    %v2462 = vunpack.c.l.b16 %v1434
    %v2463 = vunpack.c.l.b16 %v1435
    %v2464 = vunpack.c.l.b16 %v1436
    %v2465 = vunpack.c.l.b16 %v1437
    %v2466 = vunpack.c.l.b16 %v1438
    %v2467 = vunpack.c.l.b16 %v1439
    %v2468 = vunpack.c.l.b16 %v1440
    %v2469 = vunpack.c.l.b16 %v1441
    %v2470 = vunpack.c.l.b16 %v1442
    %v2471 = vunpack.c.l.b16 %v1443
    %v2472 = vunpack.c.l.b16 %v1444
    %v2473 = vunpack.c.l.b16 %v1445
    %v2474 = vunpack.c.l.b16 %v1446
    %v2475 = vunpack.c.l.b16 %v1447
    %v2476 = vunpack.c.l.b16 %v1448
    %v2477 = vunpack.c.l.b16 %v1449
    %v2478 = vunpack.c.l.b16 %v1450
    %v2479 = vunpack.c.l.b16 %v1451
    %v2480 = vunpack.c.l.b16 %v1452
    %v2481 = vunpack.c.l.b16 %v1453
    %v2482 = vunpack.c.l.b16 %v1454
    %v2483 = vunpack.c.l.b16 %v1455
    %v2484 = vunpack.c.l.b16 %v1456
    %v2485 = vunpack.c.l.b16 %v1457
    %v2486 = vunpack.c.l.b16 %v1458
    %v2487 = vunpack.c.l.b16 %v1459
    %v2488 = vunpack.c.l.b16 %v1460
    %v2489 = vunpack.c.l.b16 %v1461
    %v2490 = vunpack.c.l.b16 %v1462
    %v2491 = vunpack.c.l.b16 %v1463
    %v2492 = vunpack.c.l.b16 %v1464
    %v2493 = vunpack.c.l.b16 %v1465
    %v2494 = vunpack.c.l.b16 %v1466
    %v2495 = vunpack.c.l.b16 %v1467
    %v2496 = vunpack.c.l.b16 %v1468
    %v2497 = vunpack.c.l.b16 %v1469
    %v2498 = vunpack.c.l.b16 %v1470
    %v2499 = vunpack.c.l.b16 %v1471
    %v2500 = vunpack.c.l.b16 %v1472
    %v2501 = vunpack.c.l.b16 %v1473
    %v2502 = vunpack.c.l.b16 %v1474
    %v2503 = vunpack.c.l.b16 %v1475
    %v2504 = vunpack.c.l.b16 %v1476
    %v2505 = vunpack.c.l.b16 %v1477
    %v2506 = vunpack.c.l.b16 %v1478
    %v2507 = vunpack.c.l.b16 %v1479
    %v2508 = vunpack.c.l.b16 %v1480
    %v2509 = vunpack.c.l.b16 %v1481
    %v2510 = vunpack.c.l.b16 %v1482
    %v2511 = vunpack.c.l.b16 %v1483
    %v2512 = vunpack.c.l.b16 %v1484
    %v2513 = vunpack.c.l.b16 %v1485
    %v2514 = vunpack.c.l.b16 %v1486
    %v2515 = vunpack.c.l.b16 %v1487
    %v2516 = vunpack.c.l.b16 %v1488
    %v2517 = vunpack.c.l.b16 %v1489
    %v2518 = vunpack.c.l.b16 %v1490
    %v2519 = vunpack.c.l.b16 %v1491
    %v2520 = vunpack.c.l.b16 %v1492
    %v2521 = vunpack.c.l.b16 %v1493
    %v2522 = vunpack.c.l.b16 %v1494
    %v2523 = vunpack.c.l.b16 %v1495
    %v2524 = vunpack.c.l.b16 %v1496
    %v2525 = vunpack.c.l.b16 %v1497
    %v2526 = vunpack.c.l.b16 %v1498
    %v2527 = vunpack.c.l.b16 %v1499
    %v2528 = vunpack.c.l.b16 %v1500
    %v2529 = vunpack.c.l.b16 %v1501
    %v2530 = vunpack.c.l.b16 %v1502
    %v2531 = vunpack.c.l.b16 %v1503
    %v2532 = vunpack.c.l.b16 %v1504
    %v2533 = vunpack.c.l.b16 %v1505
    %v2534 = vunpack.c.l.b16 %v1506
    %v2535 = vunpack.c.l.b16 %v1507
    %v2536 = vunpack.c.l.b16 %v1508
    %v2537 = vunpack.c.l.b16 %v1509
    %v2538 = vunpack.c.l.b16 %v1510
    %v2539 = vunpack.c.l.b16 %v1511
    %v2540 = vunpack.c.l.b16 %v1512
    %v2541 = vunpack.c.l.b16 %v1513
    %v2542 = vunpack.c.l.b16 %v1514
    %v2543 = vunpack.c.l.b16 %v1515
    %v2544 = vunpack.c.l.b16 %v1516
    %v2545 = vunpack.c.l.b16 %v1517
    %v2546 = vunpack.c.l.b16 %v1518
    %v2547 = vunpack.c.l.b16 %v1519
    %v2548 = vunpack.c.l.b16 %v1520
    %v2549 = vunpack.c.l.b16 %v1521
    %v2550 = vunpack.c.l.b16 %v1522
    %v2551 = vunpack.c.l.b16 %v1523
    %v2552 = vunpack.c.l.b16 %v1524
    %v2553 = vunpack.c.l.b16 %v1525
    %v2554 = vunpack.c.l.b16 %v1526
    %v2555 = vunpack.c.l.b16 %v1527
    %v2556 = vunpack.c.l.b16 %v1528
    %v2557 = vunpack.c.l.b16 %v1529
    %v2558 = vunpack.c.l.b16 %v1530
    %v2559 = vunpack.c.l.b16 %v1531
    %v2560 = vunpack.c.l.b16 %v1532
    %v2561 = vunpack.c.l.b16 %v1533
    %v2562 = vunpack.c.l.b16 %v1534
    %v2563 = vunpack.c.l.b16 %v1535
    %v2564 = vunpack.c.l.b16 %v1536
    %v2565 = vunpack.c.l.b16 %v1537
    %v2566 = vunpack.c.l.b16 %v1538
    %v2567 = vunpack.c.l.b16 %v1539
    %v2568 = vunpack.c.l.b16 %v1540
    %v2569 = vunpack.c.l.b16 %v1541
    %v2570 = vunpack.c.l.b16 %v1542
    %v2571 = vunpack.c.l.b16 %v1543
    %v2572 = vunpack.c.l.b16 %v1544
    %v2573 = vunpack.c.l.b16 %v1545
    %v2574 = vunpack.c.l.b16 %v1546
    %v2575 = vunpack.c.l.b16 %v1547
    %v2576 = vunpack.c.l.b16 %v1548
    %v2577 = vunpack.c.l.b16 %v1549
    %v2578 = vunpack.c.l.b16 %v1550
    %v2579 = vunpack.c.l.b16 %v1551
    %v2580 = vunpack.c.l.b16 %v1552
    %v2581 = vunpack.c.l.b16 %v1553
    %v2582 = vunpack.c.l.b16 %v1554
    %v2583 = vunpack.c.l.b16 %v1555
    %v2584 = vunpack.c.l.b16 %v1556
    %v2585 = vunpack.c.l.b16 %v1557
    %v2586 = vunpack.c.l.b16 %v1558
    %v2587 = vunpack.c.l.b16 %v1559
    %v2588 = vunpack.c.l.b16 %v1560
    %v2589 = vunpack.c.l.b16 %v1561
    %v2590 = vunpack.c.l.b16 %v1562
    %v2591 = vunpack.c.l.b16 %v1563
    %v2592 = vunpack.c.l.b16 %v1564
    %v2593 = vunpack.c.l.b16 %v1565
    %v2594 = vunpack.c.l.b16 %v1566
    %v2595 = vunpack.c.l.b16 %v1567
    %v2596 = vunpack.c.l.b16 %v1568
    %v2597 = vunpack.c.l.b16 %v1569
    %v2598 = vunpack.c.l.b16 %v1570
    %v2599 = vunpack.c.l.b16 %v1571
    %v2600 = vunpack.c.l.b16 %v1572
    %v2601 = vunpack.c.l.b16 %v1573
    %v2602 = vunpack.c.l.b16 %v1574
    %v2603 = vunpack.c.l.b16 %v1575
    %v2604 = vunpack.c.l.b16 %v1576
    %v2605 = vunpack.c.l.b16 %v1577
    %v2606 = vunpack.c.l.b16 %v1578
    %v2607 = vunpack.c.l.b16 %v1579
    %v2608 = vunpack.c.l.b16 %v1580
    %v2609 = vunpack.c.l.b16 %v1581
    %v2610 = vunpack.c.l.b16 %v1582
    %v2611 = vunpack.c.l.b16 %v1583
    %v2612 = vunpack.c.l.b16 %v1584
    %v2613 = vunpack.c.l.b16 %v1585
    %v2614 = vunpack.c.l.b16 %v1586
    %v2615 = vunpack.c.l.b16 %v1587
    %v2616 = vunpack.c.l.b16 %v1588
    %v2617 = vunpack.c.l.b16 %v1589
    %v2618 = vunpack.c.l.b16 %v1590
    %v2619 = vunpack.c.l.b16 %v1591
    %v2620 = vunpack.c.l.b16 %v1592
    %v2621 = vunpack.c.l.b16 %v1593
    %v2622 = vunpack.c.l.b16 %v1594
    %v2623 = vunpack.c.l.b16 %v1595
    %v2624 = vunpack.c.l.b16 %v1596
    %v2625 = vunpack.c.l.b16 %v1597
    %v2626 = vunpack.c.l.b16 %v1598
    %v2627 = vunpack.c.l.b16 %v1599
    %v2628 = vunpack.c.l.b16 %v1600
    %v2629 = vunpack.c.l.b16 %v1601
    %v2630 = vunpack.c.l.b16 %v1602
    %v2631 = vunpack.c.l.b16 %v1603
    %v2632 = vunpack.c.l.b16 %v1604
    %v2633 = vunpack.c.l.b16 %v1605
    %v2634 = vunpack.c.l.b16 %v1606
    %v2635 = vunpack.c.l.b16 %v1607
    %v2636 = vunpack.c.l.b16 %v1608
    %v2637 = vunpack.c.l.b16 %v1609
    %v2638 = vunpack.c.l.b16 %v1610
    %v2639 = vunpack.c.l.b16 %v1611
    %v2640 = vunpack.c.l.b16 %v1612
    %v2641 = vunpack.c.l.b16 %v1613
    %v2642 = vunpack.c.l.b16 %v1614
    %v2643 = vunpack.c.l.b16 %v1615
    %v2644 = vunpack.c.l.b16 %v1616
    %v2645 = vunpack.c.l.b16 %v1617
    %v2646 = vunpack.c.l.b16 %v1618
    %v2647 = vunpack.c.l.b16 %v1619
    %v2648 = vunpack.c.l.b16 %v1620
    %v2649 = vunpack.c.l.b16 %v1621
    %v2650 = vunpack.c.l.b16 %v1622
    %v2651 = vunpack.c.l.b16 %v1623
    %v2652 = vunpack.c.l.b16 %v1624
    %v2653 = vunpack.c.l.b16 %v1625
    %v2654 = vunpack.c.l.b16 %v1626
    %v2655 = vunpack.c.l.b16 %v1627
    %v2656 = vunpack.c.l.b16 %v1628
    %v2657 = vunpack.c.l.b16 %v1629
    %v2658 = vunpack.c.l.b16 %v1630
    %v2659 = vunpack.c.l.b16 %v1631
    %v2660 = vunpack.c.l.b16 %v1632
    %v2661 = vunpack.c.l.b16 %v1633
    %v2662 = vunpack.c.l.b16 %v1634
    %v2663 = vunpack.c.l.b16 %v1635
    %v2664 = vunpack.c.l.b16 %v1636
    %v2665 = vunpack.c.l.b16 %v1637
    %v2666 = vunpack.c.l.b16 %v1638
    %v2667 = vunpack.c.l.b16 %v1639
    %v2668 = vunpack.c.l.b16 %v1640
    %v2669 = vunpack.c.l.b16 %v1641
    %v2670 = vunpack.c.l.b16 %v1642
    %v2671 = vunpack.c.l.b16 %v1643
    %v2672 = vunpack.c.l.b16 %v1644
    %v2673 = vunpack.c.l.b16 %v1645
    %v2674 = vunpack.c.l.b16 %v1646
    %v2675 = vunpack.c.l.b16 %v1647
    %v2676 = vunpack.c.l.b16 %v1648
    %v2677 = vunpack.c.l.b16 %v1649
    %v2678 = vunpack.c.l.b16 %v1650
    %v2679 = vunpack.c.l.b16 %v1651
    %v2680 = vunpack.c.l.b16 %v1652
    %v2681 = vunpack.c.l.b16 %v1653
    %v2682 = vunpack.c.l.b16 %v1654
    %v2683 = vunpack.c.l.b16 %v1655
    %v2684 = vunpack.c.l.b16 %v1656
    %v2685 = vunpack.c.l.b16 %v1657
    %v2686 = vunpack.c.l.b16 %v1658
    %v2687 = vunpack.c.l.b16 %v1659
    %v2688 = vunpack.c.l.b16 %v1660
    %v2689 = vunpack.c.l.b16 %v1661
    %v2690 = vunpack.c.l.b16 %v1662
    %v2691 = vunpack.c.l.b16 %v1663
    %v2692 = vunpack.c.l.b16 %v1664
    %v2693 = vunpack.c.l.b16 %v1665
    %v2694 = vunpack.c.l.b16 %v1666
    %v2695 = vunpack.c.l.b16 %v1667
    %v2696 = vunpack.c.l.b16 %v1668
    %v2697 = vunpack.c.l.b16 %v1669
    %v2698 = vunpack.c.l.b16 %v1670
    %v2699 = vunpack.c.l.b16 %v1671
    %v2700 = vunpack.c.l.b16 %v1672
    %v2701 = vunpack.c.l.b16 %v1673
    %v2702 = vunpack.c.l.b16 %v1674
    %v2703 = vunpack.c.l.b16 %v1675
    %v2704 = vunpack.c.l.b16 %v1676
    %v2705 = vunpack.c.l.b16 %v1677
    %v2706 = vunpack.c.l.b16 %v1678
    %v2707 = vunpack.c.l.b16 %v1679
    %v2708 = vunpack.c.l.b16 %v1680
    %v2709 = vunpack.c.l.b16 %v1681
    %v2710 = vunpack.c.l.b16 %v1682
    %v2711 = vunpack.c.l.b16 %v1683
    %v2712 = vunpack.c.l.b16 %v1684
    %v2713 = vunpack.c.l.b16 %v1685
    %v2714 = vunpack.c.l.b16 %v1686
    %v2715 = vunpack.c.l.b16 %v1687
    %v2716 = vunpack.c.l.b16 %v1688
    %v2717 = vunpack.c.l.b16 %v1689
    %v2718 = vunpack.c.l.b16 %v1690
    %v2719 = vunpack.c.l.b16 %v1691
    %v2720 = vunpack.c.l.b16 %v1692
    %v2721 = vunpack.c.l.b16 %v1693
    %v2722 = vunpack.c.l.b16 %v1694
    %v2723 = vunpack.c.l.b16 %v1695
    %v2724 = vunpack.c.l.b16 %v1696
    %v2725 = vunpack.c.l.b16 %v1697
    %v2726 = vunpack.c.l.b16 %v1698
    %v2727 = vunpack.c.l.b16 %v1699
    %v2728 = vunpack.c.l.b16 %v1700
    %v2729 = vunpack.c.l.b16 %v1701
    %v2730 = vunpack.c.l.b16 %v1702
    %v2731 = vunpack.c.l.b16 %v1703
    %v2732 = vunpack.c.l.b16 %v1704
    %v2733 = vunpack.c.l.b16 %v1705
    %v2734 = vunpack.c.l.b16 %v1706
    %v2735 = vunpack.c.l.b16 %v1707
    %v2736 = vunpack.c.l.b16 %v1708
    %v2737 = vpack.c.b16 %v2226, %v2225
    %v2738 = vpack.c.b16 %v2228, %v2227
    %v2739 = vpack.c.b16 %v2230, %v2229
    %v2740 = vpack.c.b16 %v2232, %v2231
    %v2741 = vpack.c.b16 %v2234, %v2233
    %v2742 = vpack.c.b16 %v2236, %v2235
    %v2743 = vpack.c.b16 %v2238, %v2237
    %v2744 = vpack.c.b16 %v2240, %v2239
    %v2745 = vpack.c.b16 %v2242, %v2241
    %v2746 = vpack.c.b16 %v2244, %v2243
    %v2747 = vpack.c.b16 %v2246, %v2245
    %v2748 = vpack.c.b16 %v2248, %v2247
    %v2749 = vpack.c.b16 %v2250, %v2249
    %v2750 = vpack.c.b16 %v2252, %v2251
    %v2751 = vpack.c.b16 %v2254, %v2253
    %v2752 = vpack.c.b16 %v2256, %v2255
    %v2753 = vpack.c.b16 %v2258, %v2257
    %v2754 = vpack.c.b16 %v2260, %v2259
    %v2755 = vpack.c.b16 %v2262, %v2261
    %v2756 = vpack.c.b16 %v2264, %v2263
    %v2757 = vpack.c.b16 %v2266, %v2265
    %v2758 = vpack.c.b16 %v2268, %v2267
    %v2759 = vpack.c.b16 %v2270, %v2269
    %v2760 = vpack.c.b16 %v2272, %v2271
    %v2761 = vpack.c.b16 %v2274, %v2273
    %v2762 = vpack.c.b16 %v2276, %v2275
    %v2763 = vpack.c.b16 %v2278, %v2277
    %v2764 = vpack.c.b16 %v2280, %v2279
    %v2765 = vpack.c.b16 %v2282, %v2281
    %v2766 = vpack.c.b16 %v2284, %v2283
    %v2767 = vpack.c.b16 %v2286, %v2285
    %v2768 = vpack.c.b16 %v2288, %v2287
    %v2769 = vpack.c.b16 %v2290, %v2289
    %v2770 = vpack.c.b16 %v2292, %v2291
    %v2771 = vpack.c.b16 %v2294, %v2293
    %v2772 = vpack.c.b16 %v2296, %v2295
    %v2773 = vpack.c.b16 %v2298, %v2297
    %v2774 = vpack.c.b16 %v2300, %v2299
    %v2775 = vpack.c.b16 %v2302, %v2301
    %v2776 = vpack.c.b16 %v2304, %v2303
    %v2777 = vpack.c.b16 %v2306, %v2305
    %v2778 = vpack.c.b16 %v2308, %v2307
    %v2779 = vpack.c.b16 %v2310, %v2309
    %v2780 = vpack.c.b16 %v2312, %v2311
    %v2781 = vpack.c.b16 %v2314, %v2313
    %v2782 = vpack.c.b16 %v2316, %v2315
    %v2783 = vpack.c.b16 %v2318, %v2317
    %v2784 = vpack.c.b16 %v2320, %v2319
    %v2785 = vpack.c.b16 %v2322, %v2321
    %v2786 = vpack.c.b16 %v2324, %v2323
    %v2787 = vpack.c.b16 %v2326, %v2325
    %v2788 = vpack.c.b16 %v2328, %v2327
    %v2789 = vpack.c.b16 %v2330, %v2329
    %v2790 = vpack.c.b16 %v2332, %v2331
    %v2791 = vpack.c.b16 %v2334, %v2333
    %v2792 = vpack.c.b16 %v2336, %v2335
    %v2793 = vpack.c.b16 %v2338, %v2337
    %v2794 = vpack.c.b16 %v2340, %v2339
    %v2795 = vpack.c.b16 %v2342, %v2341
    %v2796 = vpack.c.b16 %v2344, %v2343
    %v2797 = vpack.c.b16 %v2346, %v2345
    %v2798 = vpack.c.b16 %v2348, %v2347
    %v2799 = vpack.c.b16 %v2350, %v2349
    %v2800 = vpack.c.b16 %v2352, %v2351
    %v2801 = vpack.c.b16 %v2354, %v2353
    %v2802 = vpack.c.b16 %v2356, %v2355
    %v2803 = vpack.c.b16 %v2358, %v2357
    %v2804 = vpack.c.b16 %v2360, %v2359
    %v2805 = vpack.c.b16 %v2362, %v2361
    %v2806 = vpack.c.b16 %v2364, %v2363
    %v2807 = vpack.c.b16 %v2366, %v2365
    %v2808 = vpack.c.b16 %v2368, %v2367
    %v2809 = vpack.c.b16 %v2370, %v2369
    %v2810 = vpack.c.b16 %v2372, %v2371
    %v2811 = vpack.c.b16 %v2374, %v2373
    %v2812 = vpack.c.b16 %v2376, %v2375
    %v2813 = vpack.c.b16 %v2378, %v2377
    %v2814 = vpack.c.b16 %v2380, %v2379
    %v2815 = vpack.c.b16 %v2382, %v2381
    %v2816 = vpack.c.b16 %v2384, %v2383
    %v2817 = vpack.c.b16 %v2386, %v2385
    %v2818 = vpack.c.b16 %v2388, %v2387
    %v2819 = vpack.c.b16 %v2390, %v2389
    %v2820 = vpack.c.b16 %v2392, %v2391
    %v2821 = vpack.c.b16 %v2394, %v2393
    %v2822 = vpack.c.b16 %v2396, %v2395
    %v2823 = vpack.c.b16 %v2398, %v2397
    %v2824 = vpack.c.b16 %v2400, %v2399
    %v2825 = vpack.c.b16 %v2402, %v2401
    %v2826 = vpack.c.b16 %v2404, %v2403
    %v2827 = vpack.c.b16 %v2406, %v2405
    %v2828 = vpack.c.b16 %v2408, %v2407
    %v2829 = vpack.c.b16 %v2410, %v2409
    %v2830 = vpack.c.b16 %v2412, %v2411
    %v2831 = vpack.c.b16 %v2414, %v2413
    %v2832 = vpack.c.b16 %v2416, %v2415
    %v2833 = vpack.c.b16 %v2418, %v2417
    %v2834 = vpack.c.b16 %v2420, %v2419
    %v2835 = vpack.c.b16 %v2422, %v2421
    %v2836 = vpack.c.b16 %v2424, %v2423
    %v2837 = vpack.c.b16 %v2426, %v2425
    %v2838 = vpack.c.b16 %v2428, %v2427
    %v2839 = vpack.c.b16 %v2430, %v2429
    %v2840 = vpack.c.b16 %v2432, %v2431
    %v2841 = vpack.c.b16 %v2434, %v2433
    %v2842 = vpack.c.b16 %v2436, %v2435
    %v2843 = vpack.c.b16 %v2438, %v2437
    %v2844 = vpack.c.b16 %v2440, %v2439
    %v2845 = vpack.c.b16 %v2442, %v2441
    %v2846 = vpack.c.b16 %v2444, %v2443
    %v2847 = vpack.c.b16 %v2446, %v2445
    %v2848 = vpack.c.b16 %v2448, %v2447
    %v2849 = vpack.c.b16 %v2450, %v2449
    %v2850 = vpack.c.b16 %v2452, %v2451
    %v2851 = vpack.c.b16 %v2454, %v2453
    %v2852 = vpack.c.b16 %v2456, %v2455
    %v2853 = vpack.c.b16 %v2458, %v2457
    %v2854 = vpack.c.b16 %v2460, %v2459
    %v2855 = vpack.c.b16 %v2462, %v2461
    %v2856 = vpack.c.b16 %v2464, %v2463
    %v2857 = vpack.c.b16 %v2466, %v2465
    %v2858 = vpack.c.b16 %v2468, %v2467
    %v2859 = vpack.c.b16 %v2470, %v2469
    %v2860 = vpack.c.b16 %v2472, %v2471
    %v2861 = vpack.c.b16 %v2474, %v2473
    %v2862 = vpack.c.b16 %v2476, %v2475
    %v2863 = vpack.c.b16 %v2478, %v2477
    %v2864 = vpack.c.b16 %v2480, %v2479
    %v2865 = vpack.c.b16 %v2482, %v2481
    %v2866 = vpack.c.b16 %v2484, %v2483
    %v2867 = vpack.c.b16 %v2486, %v2485
    %v2868 = vpack.c.b16 %v2488, %v2487
    %v2869 = vpack.c.b16 %v2490, %v2489
    %v2870 = vpack.c.b16 %v2492, %v2491
    %v2871 = vpack.c.b16 %v2494, %v2493
    %v2872 = vpack.c.b16 %v2496, %v2495
    %v2873 = vpack.c.b16 %v2498, %v2497
    %v2874 = vpack.c.b16 %v2500, %v2499
    %v2875 = vpack.c.b16 %v2502, %v2501
    %v2876 = vpack.c.b16 %v2504, %v2503
    %v2877 = vpack.c.b16 %v2506, %v2505
    %v2878 = vpack.c.b16 %v2508, %v2507
    %v2879 = vpack.c.b16 %v2510, %v2509
    %v2880 = vpack.c.b16 %v2512, %v2511
    %v2881 = vpack.c.b16 %v2514, %v2513
    %v2882 = vpack.c.b16 %v2516, %v2515
    %v2883 = vpack.c.b16 %v2518, %v2517
    %v2884 = vpack.c.b16 %v2520, %v2519
    %v2885 = vpack.c.b16 %v2522, %v2521
    %v2886 = vpack.c.b16 %v2524, %v2523
    %v2887 = vpack.c.b16 %v2526, %v2525
    %v2888 = vpack.c.b16 %v2528, %v2527
    %v2889 = vpack.c.b16 %v2530, %v2529
    %v2890 = vpack.c.b16 %v2532, %v2531
    %v2891 = vpack.c.b16 %v2534, %v2533
    %v2892 = vpack.c.b16 %v2536, %v2535
    %v2893 = vpack.c.b16 %v2538, %v2537
    %v2894 = vpack.c.b16 %v2540, %v2539
    %v2895 = vpack.c.b16 %v2542, %v2541
    %v2896 = vpack.c.b16 %v2544, %v2543
    %v2897 = vpack.c.b16 %v2546, %v2545
    %v2898 = vpack.c.b16 %v2548, %v2547
    %v2899 = vpack.c.b16 %v2550, %v2549
    %v2900 = vpack.c.b16 %v2552, %v2551
    %v2901 = vpack.c.b16 %v2554, %v2553
    %v2902 = vpack.c.b16 %v2556, %v2555
    %v2903 = vpack.c.b16 %v2558, %v2557
    %v2904 = vpack.c.b16 %v2560, %v2559
    %v2905 = vpack.c.b16 %v2562, %v2561
    %v2906 = vpack.c.b16 %v2564, %v2563
    %v2907 = vpack.c.b16 %v2566, %v2565
    %v2908 = vpack.c.b16 %v2568, %v2567
    %v2909 = vpack.c.b16 %v2570, %v2569
    %v2910 = vpack.c.b16 %v2572, %v2571
    %v2911 = vpack.c.b16 %v2574, %v2573
    %v2912 = vpack.c.b16 %v2576, %v2575
    %v2913 = vpack.c.b16 %v2578, %v2577
    %v2914 = vpack.c.b16 %v2580, %v2579
    %v2915 = vpack.c.b16 %v2582, %v2581
    %v2916 = vpack.c.b16 %v2584, %v2583
    %v2917 = vpack.c.b16 %v2586, %v2585
    %v2918 = vpack.c.b16 %v2588, %v2587
    %v2919 = vpack.c.b16 %v2590, %v2589
    %v2920 = vpack.c.b16 %v2592, %v2591
    %v2921 = vpack.c.b16 %v2594, %v2593
    %v2922 = vpack.c.b16 %v2596, %v2595
    %v2923 = vpack.c.b16 %v2598, %v2597
    %v2924 = vpack.c.b16 %v2600, %v2599
    %v2925 = vpack.c.b16 %v2602, %v2601
    %v2926 = vpack.c.b16 %v2604, %v2603
    %v2927 = vpack.c.b16 %v2606, %v2605
    %v2928 = vpack.c.b16 %v2608, %v2607
    %v2929 = vpack.c.b16 %v2610, %v2609
    %v2930 = vpack.c.b16 %v2612, %v2611
    %v2931 = vpack.c.b16 %v2614, %v2613
    %v2932 = vpack.c.b16 %v2616, %v2615
    %v2933 = vpack.c.b16 %v2618, %v2617
    %v2934 = vpack.c.b16 %v2620, %v2619
    %v2935 = vpack.c.b16 %v2622, %v2621
    %v2936 = vpack.c.b16 %v2624, %v2623
    %v2937 = vpack.c.b16 %v2626, %v2625
    %v2938 = vpack.c.b16 %v2628, %v2627
    %v2939 = vpack.c.b16 %v2630, %v2629
    %v2940 = vpack.c.b16 %v2632, %v2631
    %v2941 = vpack.c.b16 %v2634, %v2633
    %v2942 = vpack.c.b16 %v2636, %v2635
    %v2943 = vpack.c.b16 %v2638, %v2637
    %v2944 = vpack.c.b16 %v2640, %v2639
    %v2945 = vpack.c.b16 %v2642, %v2641
    %v2946 = vpack.c.b16 %v2644, %v2643
    %v2947 = vpack.c.b16 %v2646, %v2645
    %v2948 = vpack.c.b16 %v2648, %v2647
    %v2949 = vpack.c.b16 %v2650, %v2649
    %v2950 = vpack.c.b16 %v2652, %v2651
    %v2951 = vpack.c.b16 %v2654, %v2653
    %v2952 = vpack.c.b16 %v2656, %v2655
    %v2953 = vpack.c.b16 %v2658, %v2657
    %v2954 = vpack.c.b16 %v2660, %v2659
    %v2955 = vpack.c.b16 %v2662, %v2661
    %v2956 = vpack.c.b16 %v2664, %v2663
    %v2957 = vpack.c.b16 %v2666, %v2665
    %v2958 = vpack.c.b16 %v2668, %v2667
    %v2959 = vpack.c.b16 %v2670, %v2669
    %v2960 = vpack.c.b16 %v2672, %v2671
    %v2961 = vpack.c.b16 %v2674, %v2673
    %v2962 = vpack.c.b16 %v2676, %v2675
    %v2963 = vpack.c.b16 %v2678, %v2677
    %v2964 = vpack.c.b16 %v2680, %v2679
    %v2965 = vpack.c.b16 %v2682, %v2681
    %v2966 = vpack.c.b16 %v2684, %v2683
    %v2967 = vpack.c.b16 %v2686, %v2685
    %v2968 = vpack.c.b16 %v2688, %v2687
    %v2969 = vpack.c.b16 %v2690, %v2689
    %v2970 = vpack.c.b16 %v2692, %v2691
    %v2971 = vpack.c.b16 %v2694, %v2693
    %v2972 = vpack.c.b16 %v2696, %v2695
    %v2973 = vpack.c.b16 %v2698, %v2697
    %v2974 = vpack.c.b16 %v2700, %v2699
    %v2975 = vpack.c.b16 %v2702, %v2701
    %v2976 = vpack.c.b16 %v2704, %v2703
    %v2977 = vpack.c.b16 %v2706, %v2705
    %v2978 = vpack.c.b16 %v2708, %v2707
    %v2979 = vpack.c.b16 %v2710, %v2709
    %v2980 = vpack.c.b16 %v2712, %v2711
    %v2981 = vpack.c.b16 %v2714, %v2713
    %v2982 = vpack.c.b16 %v2716, %v2715
    %v2983 = vpack.c.b16 %v2718, %v2717
    %v2984 = vpack.c.b16 %v2720, %v2719
    %v2985 = vpack.c.b16 %v2722, %v2721
    %v2986 = vpack.c.b16 %v2724, %v2723
    %v2987 = vpack.c.b16 %v2726, %v2725
    %v2988 = vpack.c.b16 %v2728, %v2727
    %v2989 = vpack.c.b16 %v2730, %v2729
    %v2990 = vpack.c.b16 %v2732, %v2731
    %v2991 = vpack.c.b16 %v2734, %v2733
    %v2992 = vpack.c.b16 %v2736, %v2735
    %3249 = vmatpush.bf16.msra.mxu0 %v2744
    %3250 = vmatpush.bf16.msra.mxu0 %v2743
    %3251 = vmatpush.bf16.msra.mxu0 %v2742
    %3252 = vmatpush.bf16.msra.mxu0 %v2741
    %3253 = vmatpush.bf16.msra.mxu0 %v2740
    %3254 = vmatpush.bf16.msra.mxu0 %v2739
    %3255 = vmatpush.bf16.msra.mxu0 %v2738
    %3256 = vmatpush.bf16.msra.mxu0 %v2737
    %3257 = vmatmul.bf16.gmra.mxu0 %v1165
    %v3258 = vpop.f32.mrf.mxu0
    %v3259 = vadd.f32 %v1711, %v3258
    %v3260 = vpop.f32.mrf.mxu0
    %3261 = vdwg.mxu0
    %3262 = vmatpush.bf16.msra.mxu0 %v2752
    %3263 = vmatpush.bf16.msra.mxu0 %v2751
    %3264 = vmatpush.bf16.msra.mxu0 %v2750
    %3265 = vmatpush.bf16.msra.mxu0 %v2749
    %3266 = vmatpush.bf16.msra.mxu0 %v2748
    %3267 = vmatpush.bf16.msra.mxu0 %v2747
    %3268 = vmatpush.bf16.msra.mxu0 %v2746
    %3269 = vmatpush.bf16.msra.mxu0 %v2745
    %3270 = vmatmul.bf16.gmra.mxu0 %v1166
    %v3271 = vpop.f32.mrf.mxu0
    %v3272 = vadd.f32 %v3259, %v3271
    %v3273 = vpop.f32.mrf.mxu0
    %3274 = vdwg.mxu0
    %3275 = vmatpush.bf16.msra.mxu0 %v2760
    %3276 = vmatpush.bf16.msra.mxu0 %v2759
    %3277 = vmatpush.bf16.msra.mxu0 %v2758
    %3278 = vmatpush.bf16.msra.mxu0 %v2757
    %3279 = vmatpush.bf16.msra.mxu0 %v2756
    %3280 = vmatpush.bf16.msra.mxu0 %v2755
    %3281 = vmatpush.bf16.msra.mxu0 %v2754
    %3282 = vmatpush.bf16.msra.mxu0 %v2753
    %3283 = vmatmul.bf16.gmra.mxu0 %v1167
    %v3284 = vpop.f32.mrf.mxu0
    %v3285 = vadd.f32 %v3272, %v3284
    %v3286 = vpop.f32.mrf.mxu0
    %3287 = vdwg.mxu0
    %3288 = vmatpush.bf16.msra.mxu0 %v2768
    %3289 = vmatpush.bf16.msra.mxu0 %v2767
    %3290 = vmatpush.bf16.msra.mxu0 %v2766
    %3291 = vmatpush.bf16.msra.mxu0 %v2765
    %3292 = vmatpush.bf16.msra.mxu0 %v2764
    %3293 = vmatpush.bf16.msra.mxu0 %v2763
    %3294 = vmatpush.bf16.msra.mxu0 %v2762
    %3295 = vmatpush.bf16.msra.mxu0 %v2761
    %3296 = vmatmul.bf16.gmra.mxu0 %v1168
    %v3297 = vpop.f32.mrf.mxu0
    %v3298 = vadd.f32 %v3285, %v3297
    %v3299 = vpop.f32.mrf.mxu0
    %3300 = vdwg.mxu0
    %3301 = vmatpush.bf16.msra.mxu0 %v2776
    %3302 = vmatpush.bf16.msra.mxu0 %v2775
    %3303 = vmatpush.bf16.msra.mxu0 %v2774
    %3304 = vmatpush.bf16.msra.mxu0 %v2773
    %3305 = vmatpush.bf16.msra.mxu0 %v2772
    %3306 = vmatpush.bf16.msra.mxu0 %v2771
    %3307 = vmatpush.bf16.msra.mxu0 %v2770
    %3308 = vmatpush.bf16.msra.mxu0 %v2769
    %3309 = vmatmul.bf16.gmra.mxu0 %v1169
    %v3310 = vpop.f32.mrf.mxu0
    %v3311 = vadd.f32 %v3298, %v3310
    %v3312 = vpop.f32.mrf.mxu0
    %3313 = vdwg.mxu0
    %3314 = vmatpush.bf16.msra.mxu0 %v2784
    %3315 = vmatpush.bf16.msra.mxu0 %v2783
    %3316 = vmatpush.bf16.msra.mxu0 %v2782
    %3317 = vmatpush.bf16.msra.mxu0 %v2781
    %3318 = vmatpush.bf16.msra.mxu0 %v2780
    %3319 = vmatpush.bf16.msra.mxu0 %v2779
    %3320 = vmatpush.bf16.msra.mxu0 %v2778
    %3321 = vmatpush.bf16.msra.mxu0 %v2777
    %3322 = vmatmul.bf16.gmra.mxu0 %v1170
    %v3323 = vpop.f32.mrf.mxu0
    %v3324 = vadd.f32 %v3311, %v3323
    %v3325 = vpop.f32.mrf.mxu0
    %3326 = vdwg.mxu0
    %3327 = vmatpush.bf16.msra.mxu0 %v2792
    %3328 = vmatpush.bf16.msra.mxu0 %v2791
    %3329 = vmatpush.bf16.msra.mxu0 %v2790
    %3330 = vmatpush.bf16.msra.mxu0 %v2789
    %3331 = vmatpush.bf16.msra.mxu0 %v2788
    %3332 = vmatpush.bf16.msra.mxu0 %v2787
    %3333 = vmatpush.bf16.msra.mxu0 %v2786
    %3334 = vmatpush.bf16.msra.mxu0 %v2785
    %3335 = vmatmul.bf16.gmra.mxu0 %v1171
    %v3336 = vpop.f32.mrf.mxu0
    %v3337 = vadd.f32 %v3324, %v3336
    %v3338 = vpop.f32.mrf.mxu0
    %3339 = vdwg.mxu0
    %3340 = vmatpush.bf16.msra.mxu0 %v2800
    %3341 = vmatpush.bf16.msra.mxu0 %v2799
    %3342 = vmatpush.bf16.msra.mxu0 %v2798
    %3343 = vmatpush.bf16.msra.mxu0 %v2797
    %3344 = vmatpush.bf16.msra.mxu0 %v2796
    %3345 = vmatpush.bf16.msra.mxu0 %v2795
    %3346 = vmatpush.bf16.msra.mxu0 %v2794
    %3347 = vmatpush.bf16.msra.mxu0 %v2793
    %3348 = vmatmul.bf16.gmra.mxu0 %v1172
    %v3349 = vpop.f32.mrf.mxu0
    %v3350 = vadd.f32 %v3337, %v3349
    %v3351 = vpop.f32.mrf.mxu0
    %3352 = vdwg.mxu0
    %3353 = vmatpush.bf16.msra.mxu0 %v2808
    %3354 = vmatpush.bf16.msra.mxu0 %v2807
    %3355 = vmatpush.bf16.msra.mxu0 %v2806
    %3356 = vmatpush.bf16.msra.mxu0 %v2805
    %3357 = vmatpush.bf16.msra.mxu0 %v2804
    %3358 = vmatpush.bf16.msra.mxu0 %v2803
    %3359 = vmatpush.bf16.msra.mxu0 %v2802
    %3360 = vmatpush.bf16.msra.mxu0 %v2801
    %3361 = vmatmul.bf16.gmra.mxu0 %v1173
    %v3362 = vpop.f32.mrf.mxu0
    %v3363 = vadd.f32 %v3350, %v3362
    %v3364 = vpop.f32.mrf.mxu0
    %3365 = vdwg.mxu0
    %3366 = vmatpush.bf16.msra.mxu0 %v2816
    %3367 = vmatpush.bf16.msra.mxu0 %v2815
    %3368 = vmatpush.bf16.msra.mxu0 %v2814
    %3369 = vmatpush.bf16.msra.mxu0 %v2813
    %3370 = vmatpush.bf16.msra.mxu0 %v2812
    %3371 = vmatpush.bf16.msra.mxu0 %v2811
    %3372 = vmatpush.bf16.msra.mxu0 %v2810
    %3373 = vmatpush.bf16.msra.mxu0 %v2809
    %3374 = vmatmul.bf16.gmra.mxu0 %v1174
    %v3375 = vpop.f32.mrf.mxu0
    %v3376 = vadd.f32 %v3363, %v3375
    %v3377 = vpop.f32.mrf.mxu0
    %3378 = vdwg.mxu0
    %3379 = vmatpush.bf16.msra.mxu0 %v2824
    %3380 = vmatpush.bf16.msra.mxu0 %v2823
    %3381 = vmatpush.bf16.msra.mxu0 %v2822
    %3382 = vmatpush.bf16.msra.mxu0 %v2821
    %3383 = vmatpush.bf16.msra.mxu0 %v2820
    %3384 = vmatpush.bf16.msra.mxu0 %v2819
    %3385 = vmatpush.bf16.msra.mxu0 %v2818
    %3386 = vmatpush.bf16.msra.mxu0 %v2817
    %3387 = vmatmul.bf16.gmra.mxu0 %v1175
    %v3388 = vpop.f32.mrf.mxu0
    %v3389 = vadd.f32 %v3376, %v3388
    %v3390 = vpop.f32.mrf.mxu0
    %3391 = vdwg.mxu0
    %3392 = vmatpush.bf16.msra.mxu0 %v2832
    %3393 = vmatpush.bf16.msra.mxu0 %v2831
    %3394 = vmatpush.bf16.msra.mxu0 %v2830
    %3395 = vmatpush.bf16.msra.mxu0 %v2829
    %3396 = vmatpush.bf16.msra.mxu0 %v2828
    %3397 = vmatpush.bf16.msra.mxu0 %v2827
    %3398 = vmatpush.bf16.msra.mxu0 %v2826
    %3399 = vmatpush.bf16.msra.mxu0 %v2825
    %3400 = vmatmul.bf16.gmra.mxu0 %v1176
    %v3401 = vpop.f32.mrf.mxu0
    %v3402 = vadd.f32 %v3389, %v3401
    %v3403 = vpop.f32.mrf.mxu0
    %3404 = vdwg.mxu0
    %3405 = vmatpush.bf16.msra.mxu0 %v2840
    %3406 = vmatpush.bf16.msra.mxu0 %v2839
    %3407 = vmatpush.bf16.msra.mxu0 %v2838
    %3408 = vmatpush.bf16.msra.mxu0 %v2837
    %3409 = vmatpush.bf16.msra.mxu0 %v2836
    %3410 = vmatpush.bf16.msra.mxu0 %v2835
    %3411 = vmatpush.bf16.msra.mxu0 %v2834
    %3412 = vmatpush.bf16.msra.mxu0 %v2833
    %3413 = vmatmul.bf16.gmra.mxu0 %v1177
    %v3414 = vpop.f32.mrf.mxu0
    %v3415 = vadd.f32 %v3402, %v3414
    %v3416 = vpop.f32.mrf.mxu0
    %3417 = vdwg.mxu0
    %3418 = vmatpush.bf16.msra.mxu0 %v2848
    %3419 = vmatpush.bf16.msra.mxu0 %v2847
    %3420 = vmatpush.bf16.msra.mxu0 %v2846
    %3421 = vmatpush.bf16.msra.mxu0 %v2845
    %3422 = vmatpush.bf16.msra.mxu0 %v2844
    %3423 = vmatpush.bf16.msra.mxu0 %v2843
    %3424 = vmatpush.bf16.msra.mxu0 %v2842
    %3425 = vmatpush.bf16.msra.mxu0 %v2841
    %3426 = vmatmul.bf16.gmra.mxu0 %v1178
    %v3427 = vpop.f32.mrf.mxu0
    %v3428 = vadd.f32 %v3415, %v3427
    %v3429 = vpop.f32.mrf.mxu0
    %3430 = vdwg.mxu0
    %3431 = vmatpush.bf16.msra.mxu0 %v2856
    %3432 = vmatpush.bf16.msra.mxu0 %v2855
    %3433 = vmatpush.bf16.msra.mxu0 %v2854
    %3434 = vmatpush.bf16.msra.mxu0 %v2853
    %3435 = vmatpush.bf16.msra.mxu0 %v2852
    %3436 = vmatpush.bf16.msra.mxu0 %v2851
    %3437 = vmatpush.bf16.msra.mxu0 %v2850
    %3438 = vmatpush.bf16.msra.mxu0 %v2849
    %3439 = vmatmul.bf16.gmra.mxu0 %v1179
    %v3440 = vpop.f32.mrf.mxu0
    %v3441 = vadd.f32 %v3428, %v3440
    %v3442 = vpop.f32.mrf.mxu0
    %3443 = vdwg.mxu0
    %3444 = vmatpush.bf16.msra.mxu0 %v2864
    %3445 = vmatpush.bf16.msra.mxu0 %v2863
    %3446 = vmatpush.bf16.msra.mxu0 %v2862
    %3447 = vmatpush.bf16.msra.mxu0 %v2861
    %3448 = vmatpush.bf16.msra.mxu0 %v2860
    %3449 = vmatpush.bf16.msra.mxu0 %v2859
    %3450 = vmatpush.bf16.msra.mxu0 %v2858
    %3451 = vmatpush.bf16.msra.mxu0 %v2857
    %3452 = vmatmul.bf16.gmra.mxu0 %v1180
    %v3453 = vpop.f32.mrf.mxu0
    %v3454 = vadd.f32 %v3441, %v3453
    %v3455 = vpop.f32.mrf.mxu0
    %3456 = vdwg.mxu0
    %3457 = vmatpush.bf16.msra.mxu0 %v2872
    %3458 = vmatpush.bf16.msra.mxu0 %v2871
    %3459 = vmatpush.bf16.msra.mxu0 %v2870
    %3460 = vmatpush.bf16.msra.mxu0 %v2869
    %3461 = vmatpush.bf16.msra.mxu0 %v2868
    %3462 = vmatpush.bf16.msra.mxu0 %v2867
    %3463 = vmatpush.bf16.msra.mxu0 %v2866
    %3464 = vmatpush.bf16.msra.mxu0 %v2865
    %3465 = vmatmul.bf16.gmra.mxu0 %v1181
    %v3466 = vpop.f32.mrf.mxu0
    %v3467 = vadd.f32 %v3454, %v3466
    %v3468 = vpop.f32.mrf.mxu0
    %3469 = vdwg.mxu0
    %3470 = vmatpush.bf16.msra.mxu0 %v2880
    %3471 = vmatpush.bf16.msra.mxu0 %v2879
    %3472 = vmatpush.bf16.msra.mxu0 %v2878
    %3473 = vmatpush.bf16.msra.mxu0 %v2877
    %3474 = vmatpush.bf16.msra.mxu0 %v2876
    %3475 = vmatpush.bf16.msra.mxu0 %v2875
    %3476 = vmatpush.bf16.msra.mxu0 %v2874
    %3477 = vmatpush.bf16.msra.mxu0 %v2873
    %3478 = vmatmul.bf16.gmra.mxu0 %v1182
    %v3479 = vpop.f32.mrf.mxu0
    %v3480 = vadd.f32 %v3467, %v3479
    %v3481 = vpop.f32.mrf.mxu0
    %3482 = vdwg.mxu0
    %3483 = vmatpush.bf16.msra.mxu0 %v2888
    %3484 = vmatpush.bf16.msra.mxu0 %v2887
    %3485 = vmatpush.bf16.msra.mxu0 %v2886
    %3486 = vmatpush.bf16.msra.mxu0 %v2885
    %3487 = vmatpush.bf16.msra.mxu0 %v2884
    %3488 = vmatpush.bf16.msra.mxu0 %v2883
    %3489 = vmatpush.bf16.msra.mxu0 %v2882
    %3490 = vmatpush.bf16.msra.mxu0 %v2881
    %3491 = vmatmul.bf16.gmra.mxu0 %v1183
    %v3492 = vpop.f32.mrf.mxu0
    %v3493 = vadd.f32 %v3480, %v3492
    %v3494 = vpop.f32.mrf.mxu0
    %3495 = vdwg.mxu0
    %3496 = vmatpush.bf16.msra.mxu0 %v2896
    %3497 = vmatpush.bf16.msra.mxu0 %v2895
    %3498 = vmatpush.bf16.msra.mxu0 %v2894
    %3499 = vmatpush.bf16.msra.mxu0 %v2893
    %3500 = vmatpush.bf16.msra.mxu0 %v2892
    %3501 = vmatpush.bf16.msra.mxu0 %v2891
    %3502 = vmatpush.bf16.msra.mxu0 %v2890
    %3503 = vmatpush.bf16.msra.mxu0 %v2889
    %3504 = vmatmul.bf16.gmra.mxu0 %v1184
    %v3505 = vpop.f32.mrf.mxu0
    %v3506 = vadd.f32 %v3493, %v3505
    %v3507 = vpop.f32.mrf.mxu0
    %3508 = vdwg.mxu0
    %3509 = vmatpush.bf16.msra.mxu0 %v2904
    %3510 = vmatpush.bf16.msra.mxu0 %v2903
    %3511 = vmatpush.bf16.msra.mxu0 %v2902
    %3512 = vmatpush.bf16.msra.mxu0 %v2901
    %3513 = vmatpush.bf16.msra.mxu0 %v2900
    %3514 = vmatpush.bf16.msra.mxu0 %v2899
    %3515 = vmatpush.bf16.msra.mxu0 %v2898
    %3516 = vmatpush.bf16.msra.mxu0 %v2897
    %3517 = vmatmul.bf16.gmra.mxu0 %v1185
    %v3518 = vpop.f32.mrf.mxu0
    %v3519 = vadd.f32 %v3506, %v3518
    %v3520 = vpop.f32.mrf.mxu0
    %3521 = vdwg.mxu0
    %3522 = vmatpush.bf16.msra.mxu0 %v2912
    %3523 = vmatpush.bf16.msra.mxu0 %v2911
    %3524 = vmatpush.bf16.msra.mxu0 %v2910
    %3525 = vmatpush.bf16.msra.mxu0 %v2909
    %3526 = vmatpush.bf16.msra.mxu0 %v2908
    %3527 = vmatpush.bf16.msra.mxu0 %v2907
    %3528 = vmatpush.bf16.msra.mxu0 %v2906
    %3529 = vmatpush.bf16.msra.mxu0 %v2905
    %3530 = vmatmul.bf16.gmra.mxu0 %v1186
    %v3531 = vpop.f32.mrf.mxu0
    %v3532 = vadd.f32 %v3519, %v3531
    %v3533 = vpop.f32.mrf.mxu0
    %3534 = vdwg.mxu0
    %3535 = vmatpush.bf16.msra.mxu0 %v2920
    %3536 = vmatpush.bf16.msra.mxu0 %v2919
    %3537 = vmatpush.bf16.msra.mxu0 %v2918
    %3538 = vmatpush.bf16.msra.mxu0 %v2917
    %3539 = vmatpush.bf16.msra.mxu0 %v2916
    %3540 = vmatpush.bf16.msra.mxu0 %v2915
    %3541 = vmatpush.bf16.msra.mxu0 %v2914
    %3542 = vmatpush.bf16.msra.mxu0 %v2913
    %3543 = vmatmul.bf16.gmra.mxu0 %v1187
    %v3544 = vpop.f32.mrf.mxu0
    %v3545 = vadd.f32 %v3532, %v3544
    %v3546 = vpop.f32.mrf.mxu0
    %3547 = vdwg.mxu0
    %3548 = vmatpush.bf16.msra.mxu0 %v2928
    %3549 = vmatpush.bf16.msra.mxu0 %v2927
    %3550 = vmatpush.bf16.msra.mxu0 %v2926
    %3551 = vmatpush.bf16.msra.mxu0 %v2925
    %3552 = vmatpush.bf16.msra.mxu0 %v2924
    %3553 = vmatpush.bf16.msra.mxu0 %v2923
    %3554 = vmatpush.bf16.msra.mxu0 %v2922
    %3555 = vmatpush.bf16.msra.mxu0 %v2921
    %3556 = vmatmul.bf16.gmra.mxu0 %v1188
    %v3557 = vpop.f32.mrf.mxu0
    %v3558 = vadd.f32 %v3545, %v3557
    %v3559 = vpop.f32.mrf.mxu0
    %3560 = vdwg.mxu0
    %3561 = vmatpush.bf16.msra.mxu0 %v2936
    %3562 = vmatpush.bf16.msra.mxu0 %v2935
    %3563 = vmatpush.bf16.msra.mxu0 %v2934
    %3564 = vmatpush.bf16.msra.mxu0 %v2933
    %3565 = vmatpush.bf16.msra.mxu0 %v2932
    %3566 = vmatpush.bf16.msra.mxu0 %v2931
    %3567 = vmatpush.bf16.msra.mxu0 %v2930
    %3568 = vmatpush.bf16.msra.mxu0 %v2929
    %3569 = vmatmul.bf16.gmra.mxu0 %v1189
    %v3570 = vpop.f32.mrf.mxu0
    %v3571 = vadd.f32 %v3558, %v3570
    %v3572 = vpop.f32.mrf.mxu0
    %3573 = vdwg.mxu0
    %3574 = vmatpush.bf16.msra.mxu0 %v2944
    %3575 = vmatpush.bf16.msra.mxu0 %v2943
    %3576 = vmatpush.bf16.msra.mxu0 %v2942
    %3577 = vmatpush.bf16.msra.mxu0 %v2941
    %3578 = vmatpush.bf16.msra.mxu0 %v2940
    %3579 = vmatpush.bf16.msra.mxu0 %v2939
    %3580 = vmatpush.bf16.msra.mxu0 %v2938
    %3581 = vmatpush.bf16.msra.mxu0 %v2937
    %3582 = vmatmul.bf16.gmra.mxu0 %v1190
    %v3583 = vpop.f32.mrf.mxu0
    %v3584 = vadd.f32 %v3571, %v3583
    %v3585 = vpop.f32.mrf.mxu0
    %3586 = vdwg.mxu0
    %3587 = vmatpush.bf16.msra.mxu0 %v2952
    %3588 = vmatpush.bf16.msra.mxu0 %v2951
    %3589 = vmatpush.bf16.msra.mxu0 %v2950
    %3590 = vmatpush.bf16.msra.mxu0 %v2949
    %3591 = vmatpush.bf16.msra.mxu0 %v2948
    %3592 = vmatpush.bf16.msra.mxu0 %v2947
    %3593 = vmatpush.bf16.msra.mxu0 %v2946
    %3594 = vmatpush.bf16.msra.mxu0 %v2945
    %3595 = vmatmul.bf16.gmra.mxu0 %v1191
    %v3596 = vpop.f32.mrf.mxu0
    %v3597 = vadd.f32 %v3584, %v3596
    %v3598 = vpop.f32.mrf.mxu0
    %3599 = vdwg.mxu0
    %3600 = vmatpush.bf16.msra.mxu0 %v2960
    %3601 = vmatpush.bf16.msra.mxu0 %v2959
    %3602 = vmatpush.bf16.msra.mxu0 %v2958
    %3603 = vmatpush.bf16.msra.mxu0 %v2957
    %3604 = vmatpush.bf16.msra.mxu0 %v2956
    %3605 = vmatpush.bf16.msra.mxu0 %v2955
    %3606 = vmatpush.bf16.msra.mxu0 %v2954
    %3607 = vmatpush.bf16.msra.mxu0 %v2953
    %3608 = vmatmul.bf16.gmra.mxu0 %v1192
    %v3609 = vpop.f32.mrf.mxu0
    %v3610 = vadd.f32 %v3597, %v3609
    %v3611 = vpop.f32.mrf.mxu0
    %3612 = vdwg.mxu0
    %3613 = vmatpush.bf16.msra.mxu0 %v2968
    %3614 = vmatpush.bf16.msra.mxu0 %v2967
    %3615 = vmatpush.bf16.msra.mxu0 %v2966
    %3616 = vmatpush.bf16.msra.mxu0 %v2965
    %3617 = vmatpush.bf16.msra.mxu0 %v2964
    %3618 = vmatpush.bf16.msra.mxu0 %v2963
    %3619 = vmatpush.bf16.msra.mxu0 %v2962
    %3620 = vmatpush.bf16.msra.mxu0 %v2961
    %3621 = vmatmul.bf16.gmra.mxu0 %v1193
    %v3622 = vpop.f32.mrf.mxu0
    %v3623 = vadd.f32 %v3610, %v3622
    %v3624 = vpop.f32.mrf.mxu0
    %3625 = vdwg.mxu0
    %3626 = vmatpush.bf16.msra.mxu0 %v2976
    %3627 = vmatpush.bf16.msra.mxu0 %v2975
    %3628 = vmatpush.bf16.msra.mxu0 %v2974
    %3629 = vmatpush.bf16.msra.mxu0 %v2973
    %3630 = vmatpush.bf16.msra.mxu0 %v2972
    %3631 = vmatpush.bf16.msra.mxu0 %v2971
    %3632 = vmatpush.bf16.msra.mxu0 %v2970
    %3633 = vmatpush.bf16.msra.mxu0 %v2969
    %3634 = vmatmul.bf16.gmra.mxu0 %v1194
    %v3635 = vpop.f32.mrf.mxu0
    %v3636 = vadd.f32 %v3623, %v3635
    %v3637 = vpop.f32.mrf.mxu0
    %3638 = vdwg.mxu0
    %3639 = vmatpush.bf16.msra.mxu0 %v2984
    %3640 = vmatpush.bf16.msra.mxu0 %v2983
    %3641 = vmatpush.bf16.msra.mxu0 %v2982
    %3642 = vmatpush.bf16.msra.mxu0 %v2981
    %3643 = vmatpush.bf16.msra.mxu0 %v2980
    %3644 = vmatpush.bf16.msra.mxu0 %v2979
    %3645 = vmatpush.bf16.msra.mxu0 %v2978
    %3646 = vmatpush.bf16.msra.mxu0 %v2977
    %3647 = vmatmul.bf16.gmra.mxu0 %v1195
    %v3648 = vpop.f32.mrf.mxu0
    %v3649 = vadd.f32 %v3636, %v3648
    %v3650 = vpop.f32.mrf.mxu0
    %3651 = vdwg.mxu0
    %3652 = vmatpush.bf16.msra.mxu0 %v2992
    %3653 = vmatpush.bf16.msra.mxu0 %v2991
    %3654 = vmatpush.bf16.msra.mxu0 %v2990
    %3655 = vmatpush.bf16.msra.mxu0 %v2989
    %3656 = vmatpush.bf16.msra.mxu0 %v2988
    %3657 = vmatpush.bf16.msra.mxu0 %v2987
    %3658 = vmatpush.bf16.msra.mxu0 %v2986
    %3659 = vmatpush.bf16.msra.mxu0 %v2985
    %3660 = vmatmul.bf16.gmra.mxu0 %v1196
    %v3661 = vpop.f32.mrf.mxu0
    %v3662 = vadd.f32 %v3649, %v3661
    %v3663 = vpop.f32.mrf.mxu0
    %3664 = vdwg.mxu0
    %v3665 = vstv %s26
    %v3666 = vmul.f32 %v3662, %v3665
    %v3667 = vtanh.pop %v3666
    %3668 = vst [vmem:[#allocation3] sm:$0xff] %v3667
    // Predicated region
    $region26: #{txtnet_forward.1} parent=1 // pred_check
      _
    $region27: #{txtnet_forward.1} parent=1 // pred_check_branch
      %3670 = sbr.rel (0) target = $region29
    $region28: #{txtnet_forward.1} parent=1 // pred_region
      %3672 = vsyncadd [#allocation4], 0
      %s3674 = sshll.u32 [#allocation3], 4
      %s3675 = int_to_ptr.vmem [resolvable:$true] %s3674
      %s3676 = sshll.u32 %s6, 4
      %s3677 = int_to_ptr.hbm [resolvable:$true] %s3676
      %3679 = dma.vmem_to_hbm [thread:$0]  %s3675, 128, %s3677, [#allocation4]
    $region29: #{txtnet_forward.1} parent=1 // pred_fallthru
      _
    // Predicated region
    $region30: #{txtnet_forward.1} parent=1 // pred_check
      _
    $region31: #{txtnet_forward.1} parent=1 // pred_check_branch
      %3681 = sbr.rel (0) target = $region33
    $region32: #{txtnet_forward.1} parent=1 // pred_region
      %3683 = dma.done [#allocation4], 128
    $region33: #{txtnet_forward.1} parent=1 // pred_fallthru
      _
    %3684 = vsyncpa [#allocation4], 1

</llo_original>
